<compile_context>
chip_gen: v5e
topology: v5e:2x2
jax: 0.10.0
libtpu: 0.0.40
codegen_flags: <defaults>
</compile_context>

<pallas_src>
import jax
import jax.numpy as jnp
from jax.experimental import pallas as pl
from jax.experimental.pallas import tpu as pltpu

HIDDEN = 32       # hidden_dim
HEADS = 4         # heads (concat=False -> mean over heads)
NUM_LAYERS = 3
NEG_SLOPE = 0.2   # PyG GATConv default LeakyReLU slope


def _use_bf16_mxu():
    # bf16 MXU operands (f32 accumulate) pay off on v6e/v7x. Only the matmul
    # operands are cast; all elementwise math stays f32 (v5e has no bf16 VPU).
    try:
        kind = jax.devices()[0].device_kind.lower()
        return ("v6" in kind) or ("v7" in kind)
    except Exception:
        return False


MXU_BF16 = _use_bf16_mxu()


def _mm(a, b):
    if MXU_BF16:
        a = a.astype(jnp.bfloat16)
        b = b.astype(jnp.bfloat16)
    return jnp.dot(a, b, preferred_element_type=jnp.float32)


# ---------------- single fused forward kernel ----------------
def fused_forward_kernel(x_ref, adj_ref, pool_ref,
                         wp_ref, wg_ref, att_ref, small_ref, wfc_ref,
                         o_ref):
    adj_mask = adj_ref[...] > 0                                    # [N, N] bool (adj streamed bf16)

    # input projection
    b_proj = small_ref[0:1, :]                                     # [1, H]
    x = _mm(x_ref[...], wp_ref[...]) + b_proj                      # [N, H]

    for l in range(NUM_LAYERS):                                    # static unroll (3)
        # all 4 heads projected in one lane-dense MXU push
        hh_all = _mm(x, wg_ref[l])                                 # [N, HEADS*H] = [N, 128], f32

        # batched attention logits via block-diagonal a_dst / a_src (kept f32)
        att = att_ref[l]                                           # [2*HEADS, HEADS*H] = [8, 128]
        s_dst = jax.lax.dot_general(                               # [N, HEADS]
            hh_all, att[0:HEADS], (((1,), (1,)), ((), ())),
            preferred_element_type=jnp.float32)
        s_src_t = jax.lax.dot_general(                             # [HEADS, N]
            att[HEADS:2 * HEADS], hh_all, (((1,), (1,)), ((), ())),
            preferred_element_type=jnp.float32)

        acc = jnp.zeros_like(x)
        for hd in range(HEADS):                                    # static unroll (4)
            hh = hh_all[:, hd * HIDDEN:(hd + 1) * HIDDEN]          # static 32-lane slice
            # e[i, j] = a_dst . h_i + a_src . h_j   (edge j -> i)
            e = s_dst[:, hd:hd + 1] + s_src_t[hd:hd + 1, :]        # [N, N]
            e = jnp.where(e > 0, e, NEG_SLOPE * e)                 # LeakyReLU
            e = jnp.where(adj_mask, e, -1e30)                      # mask BEFORE max & exp (no inf*0 NaN)
            e = e - jnp.max(e, axis=1, keepdims=True)              # stable softmax (masked max)
            p = jnp.exp(e)                                         # non-edges underflow to exactly 0
            inv = 1.0 / jnp.sum(p, axis=1, keepdims=True)          # exact reciprocal
            acc = acc + _mm(p * inv, hh)                           # alpha @ hh
        out = acc * (1.0 / HEADS) + small_ref[1 + l:2 + l, :]      # mean over heads + GAT bias
        out = jnp.where(out > 0, out,
                        jnp.exp(jnp.minimum(out, 0.0)) - 1.0)      # ELU (clipped exp)
        x = out + x                                                # residual

    # global mean pool + MLP head
    pooled = _mm(pool_ref[...], x)                                 # [G, H]
    w1 = wfc_ref[:, 0:HIDDEN]                                      # [H, H]
    w2 = wfc_ref[:, HIDDEN:HIDDEN + 1]                             # [H, 1]
    b1 = small_ref[4:5, :]                                         # [1, H]
    b2 = small_ref[5:6, 0:1]                                       # [1, 1]
    h1 = jnp.maximum(_mm(pooled, w1) + b1, 0.0)                    # ReLU(fc1)
    # fc2, written lane-dense as [1, G]:  (w2^T) @ (h1^T)
    out_row = jax.lax.dot_general(w2, h1, (((0,), (1,)), ((), ())),
                                  preferred_element_type=jnp.float32)  # [1, G]
    o_ref[...] = out_row + b2


# ---------------- host-side packing of parameters into kernel layout ----------------
def _blockdiag(vecs):
    # vecs: [L, HEADS, HIDDEN] -> [L, HEADS, HEADS*HIDDEN] with vecs[l, h] in the
    # h-th 32-lane block of row h (block-diagonal), zeros elsewhere.
    eye = jnp.eye(HEADS, dtype=vecs.dtype)
    return jnp.einsum("lhd,hk->lkhd", vecs, eye).reshape(NUM_LAYERS, HEADS, HEADS * HIDDEN)


def pack_params(params):
    # [L, H, HID, HID] -> [L, HID, HEADS*HID] lane-dense per-layer slabs
    w_gat_packed = jnp.transpose(params["w_gat"], (0, 2, 1, 3)).reshape(
        NUM_LAYERS, HIDDEN, HEADS * HIDDEN)
    # a_dst (rows 0..HEADS-1) and a_src (rows HEADS..2*HEADS-1) block diagonals
    att_bd = jnp.concatenate(
        [_blockdiag(params["adst"]), _blockdiag(params["asrc"])], axis=1)  # [L, 2H, H*HID]
    # small-vector slab: row0=b_proj, rows1..3=b_gat, row4=b1, row5[0]=b2
    small = jnp.zeros((8, HIDDEN), jnp.float32)
    small = small.at[0].set(params["b_proj"])
    small = small.at[1:1 + NUM_LAYERS].set(params["b_gat"])
    small = small.at[4].set(params["b1"])
    small = small.at[5, 0].set(params["b2"][0])
    w_fc = jnp.concatenate([params["w1"], params["w2"]], axis=1)   # [HID, HID+1]
    return {
        "w_proj": params["w_proj"],
        "w_gat_packed": w_gat_packed,
        "att_bd": att_bd,
        "small": small,
        "w_fc": w_fc,
    }


def gat_regressor_forward(x_in, adj, pool, params):
    kin = pack_params(params)
    g = pool.shape[0]
    vmem = pl.BlockSpec(memory_space=pltpu.MemorySpace.VMEM)
    out = pl.pallas_call(
        fused_forward_kernel,
        out_shape=jax.ShapeDtypeStruct((1, g), jnp.float32),
        in_specs=[vmem] * 8,
        out_specs=vmem,
    )(x_in, adj.astype(jnp.bfloat16), pool,
      kin["w_proj"], kin["w_gat_packed"], kin["att_bd"], kin["small"], kin["w_fc"])
    return out[0]                                                  # [G]  (.squeeze(1))


# ---------------- pure-JAX reference for sanity ----------------
def reference_forward(x_in, adj, pool, params):
    x = x_in @ params["w_proj"] + params["b_proj"]
    for l in range(NUM_LAYERS):
        res = x
        acc = jnp.zeros_like(x)
        for hd in range(HEADS):
            hh = x @ params["w_gat"][l, hd]
            s_dst = hh @ params["adst"][l, hd]
            s_src = hh @ params["asrc"][l, hd]
            e = s_dst[:, None] + s_src[None, :]
            e = jnp.where(e > 0, e, NEG_SLOPE * e)
            e = jnp.where(adj > 0, e, -1e30)
            e = e - e.max(axis=1, keepdims=True)
            p = jnp.exp(e) * adj
            alpha = p / p.sum(axis=1, keepdims=True)
            acc = acc + alpha @ hh
        o = acc / HEADS + params["b_gat"][l]
        o = jnp.where(o > 0, o, jnp.exp(o) - 1.0)
        x = o + res
    g = pool @ x
    h1 = jnp.maximum(g @ params["w1"] + params["b1"], 0.0)
    return (h1 @ params["w2"] + params["b2"])[:, 0]


def init_params(key, in_dim):
    n_keys = 2 + 3 * NUM_LAYERS + 4
    ks = list(jax.random.split(key, n_keys))
    k = iter(ks)

    def unif(kk, shape, fan_in):
        bound = 1.0 / jnp.sqrt(jnp.float32(fan_in))
        return jax.random.uniform(kk, shape, jnp.float32, -bound, bound)

    w_gat, asrc, adst = [], [], []
    w_proj = unif(next(k), (in_dim, HIDDEN), in_dim)
    b_proj = unif(next(k), (HIDDEN,), in_dim)
    for _ in range(NUM_LAYERS):
        w_gat.append(unif(next(k), (1, HEADS, HIDDEN, HIDDEN), HIDDEN))
        asrc.append(unif(next(k), (1, HEADS, HIDDEN), HIDDEN))
        adst.append(unif(next(k), (1, HEADS, HIDDEN), HIDDEN))
    return {
        "w_proj": w_proj,
        "b_proj": b_proj,
        "w_gat": jnp.concatenate(w_gat, axis=0),                   # [L, HEADS, HID, HID]
        "asrc": jnp.concatenate(asrc, axis=0),                     # [L, HEADS, HID]
        "adst": jnp.concatenate(adst, axis=0),                     # [L, HEADS, HID]
        "b_gat": jnp.zeros((NUM_LAYERS, HIDDEN), jnp.float32),     # GATConv bias init = zeros
        "w1": unif(next(k), (HIDDEN, HIDDEN), HIDDEN),
        "b1": unif(next(k), (HIDDEN,), HIDDEN),
        "w2": unif(next(k), (HIDDEN, 1), HIDDEN),
        "b2": unif(next(k), (1,), HIDDEN),
    }


if __name__ == "__main__":
    # Small deterministic problem: 2 graphs of 8 nodes each (N=16),
    # input_dim=6, level_enc_dim=2 -> node feature dim 8, hidden=32, heads=4.
    N, G = 16, 2
    input_dim, level_enc_dim = 6, 2
    in_dim = input_dim + level_enc_dim

    key = jax.random.PRNGKey(0)
    kx, kp = jax.random.split(key)
    x_in = jax.random.normal(kx, (N, in_dim), jnp.float32)

    # Bidirectional ring edges inside each graph (edge_index: [2, E], src/dst).
    src, dst = [], []
    for g in range(G):
        base = g * 8
        for i in range(8):
            a, b = base + i, base + (i + 1) % 8
            src += [a, b]
            dst += [b, a]
    edge_index = jnp.array([src, dst], dtype=jnp.int32)            # [2, 32]
    batch = jnp.array([0] * 8 + [1] * 8, dtype=jnp.int32)          # [16]

    # Dense adjacency mask adj[i, j] = 1 iff edge j -> i, plus self loops
    # (PyG GATConv default add_self_loops=True).
    adj = jnp.zeros((N, N), jnp.float32).at[edge_index[1], edge_index[0]].set(1.0)
    adj = jnp.maximum(adj, jnp.eye(N, dtype=jnp.float32))

    # Global mean pool matrix [G, N].
    one_hot = (batch[None, :] == jnp.arange(G)[:, None]).astype(jnp.float32)
    pool = one_hot / jnp.sum(one_hot, axis=1, keepdims=True)

    params = init_params(kp, in_dim)

    out = gat_regressor_forward(x_in, adj, pool, params)
    out = jax.block_until_ready(out)

    ref = reference_forward(x_in, adj, pool, params)
    assert out.shape == (G,)
    # f32 path matches tightly now that the softmax uses a masked max and an
    # exact reciprocal; bf16 MXU operands (v6e/v7x) get a correspondingly
    # looser tolerance.
    tol = 5e-2 if MXU_BF16 else 1e-4
    assert jnp.allclose(out, ref, atol=tol, rtol=tol), (out, ref)

    print("KERNEL_OK")
</pallas_src>

<mosaic_0001>
module attributes {stable_mosaic.version = 11 : i64} {
  func.func @fused_forward_kernel(%arg0: memref<16x8xf32, #tpu.memory_space<vmem>>, %arg1: memref<16x16xbf16, #tpu.memory_space<vmem>>, %arg2: memref<2x16xf32, #tpu.memory_space<vmem>>, %arg3: memref<8x32xf32, #tpu.memory_space<vmem>>, %arg4: memref<3x32x128xf32, #tpu.memory_space<vmem>>, %arg5: memref<3x8x128xf32, #tpu.memory_space<vmem>>, %arg6: memref<8x32xf32, #tpu.memory_space<vmem>>, %arg7: memref<32x33xf32, #tpu.memory_space<vmem>>, %arg8: memref<1x2xf32, #tpu.memory_space<vmem>>) attributes {dimension_semantics = [], scalar_prefetch = 0 : i64, scratch_operands = 0 : i64, tpu.core_type = #tpu.core_type<tc>} {
    %c0 = arith.constant 0 : index
    %c0_0 = arith.constant 0 : index
    %0 = vector.load %arg1[%c0, %c0_0] : memref<16x16xbf16, #tpu.memory_space<vmem>>, vector<16x16xbf16>
    %cst = arith.constant 0.000000e+00 : bf16
    %1 = vector.broadcast %cst : bf16 to vector<16x16xbf16>
    %2 = arith.cmpf ogt, %0, %1 : vector<16x16xbf16>
    %c0_1 = arith.constant 0 : index
    %c0_2 = arith.constant 0 : index
    %3 = vector.load %arg6[%c0_1, %c0_2] : memref<8x32xf32, #tpu.memory_space<vmem>>, vector<1x32xf32>
    %c0_3 = arith.constant 0 : index
    %c0_4 = arith.constant 0 : index
    %4 = vector.load %arg0[%c0_3, %c0_4] : memref<16x8xf32, #tpu.memory_space<vmem>>, vector<16x8xf32>
    %c0_5 = arith.constant 0 : index
    %c0_6 = arith.constant 0 : index
    %5 = vector.load %arg3[%c0_5, %c0_6] : memref<8x32xf32, #tpu.memory_space<vmem>>, vector<8x32xf32>
    %cst_7 = arith.constant dense<0.000000e+00> : vector<16x32xf32>
    %6 = tpu.matmul %4, %5, %cst_7 {dimension_numbers = #tpu.dot_dimension_numbers<[1], [0], [0], [1], [0, 0, 1, 1], [], []>} : vector<16x8xf32>, vector<8x32xf32>, vector<16x32xf32> -> vector<16x32xf32>
    %7 = vector.broadcast %3 : vector<1x32xf32> to vector<16x32xf32>
    %8 = arith.addf %6, %7 : vector<16x32xf32>
    %c0_8 = arith.constant 0 : index
    %c0_9 = arith.constant 0 : index
    %c0_10 = arith.constant 0 : index
    %9 = vector.load %arg4[%c0_8, %c0_9, %c0_10] : memref<3x32x128xf32, #tpu.memory_space<vmem>>, vector<1x32x128xf32>
    %10 = vector.shape_cast %9 : vector<1x32x128xf32> to vector<32x128xf32>
    %cst_11 = arith.constant dense<0.000000e+00> : vector<16x128xf32>
    %11 = tpu.matmul %8, %10, %cst_11 {dimension_numbers = #tpu.dot_dimension_numbers<[1], [0], [0], [1], [0, 0, 1, 1], [], []>} : vector<16x32xf32>, vector<32x128xf32>, vector<16x128xf32> -> vector<16x128xf32>
    %c0_12 = arith.constant 0 : index
    %c0_13 = arith.constant 0 : index
    %c0_14 = arith.constant 0 : index
    %12 = vector.load %arg5[%c0_12, %c0_13, %c0_14] : memref<3x8x128xf32, #tpu.memory_space<vmem>>, vector<1x8x128xf32>
    %13 = vector.shape_cast %12 : vector<1x8x128xf32> to vector<8x128xf32>
    %14 = vector.extract_strided_slice %13 {offsets = [0, 0], sizes = [4, 128], strides = [1, 1]} : vector<8x128xf32> to vector<4x128xf32>
    %cst_15 = arith.constant dense<0.000000e+00> : vector<16x4xf32>
    %15 = tpu.matmul %11, %14, %cst_15 {dimension_numbers = #tpu.dot_dimension_numbers<[1], [1], [0], [0], [0, 0, 1, 0], [], []>} : vector<16x128xf32>, vector<4x128xf32>, vector<16x4xf32> -> vector<16x4xf32>
    %16 = vector.extract_strided_slice %13 {offsets = [4, 0], sizes = [4, 128], strides = [1, 1]} : vector<8x128xf32> to vector<4x128xf32>
    %cst_16 = arith.constant dense<0.000000e+00> : vector<4x16xf32>
    %17 = tpu.matmul %16, %11, %cst_16 {dimension_numbers = #tpu.dot_dimension_numbers<[1], [1], [0], [0], [0, 0, 1, 0], [], []>} : vector<4x128xf32>, vector<16x128xf32>, vector<4x16xf32> -> vector<4x16xf32>
    %cst_17 = arith.constant 0.000000e+00 : f32
    %18 = vector.broadcast %cst_17 : f32 to vector<16x32xf32>
    %19 = vector.extract_strided_slice %11 {offsets = [0, 0], sizes = [16, 32], strides = [1, 1]} : vector<16x128xf32> to vector<16x32xf32>
    %20 = vector.extract_strided_slice %15 {offsets = [0, 0], sizes = [16, 1], strides = [1, 1]} : vector<16x4xf32> to vector<16x1xf32>
    %21 = vector.extract_strided_slice %17 {offsets = [0, 0], sizes = [1, 16], strides = [1, 1]} : vector<4x16xf32> to vector<1x16xf32>
    %22 = vector.broadcast %20 : vector<16x1xf32> to vector<16x16xf32>
    %23 = vector.broadcast %21 : vector<1x16xf32> to vector<16x16xf32>
    %24 = arith.addf %22, %23 : vector<16x16xf32>
    %cst_18 = arith.constant 0.000000e+00 : f32
    %25 = vector.broadcast %cst_18 : f32 to vector<16x16xf32>
    %26 = arith.cmpf ogt, %24, %25 : vector<16x16xf32>
    %cst_19 = arith.constant 2.000000e-01 : f32
    %27 = vector.broadcast %cst_19 : f32 to vector<16x16xf32>
    %28 = arith.mulf %27, %24 : vector<16x16xf32>
    %29 = arith.select %26, %24, %28 : vector<16x16xi1>, vector<16x16xf32>
    %cst_20 = arith.constant -1.000000e+30 : f32
    %30 = vector.broadcast %cst_20 : f32 to vector<16x16xf32>
    %31 = arith.select %2, %29, %30 : vector<16x16xi1>, vector<16x16xf32>
    %cst_21 = arith.constant dense<0xFF800000> : vector<16xf32>
    %32 = vector.multi_reduction <maximumf>, %31, %cst_21 [1] : vector<16x16xf32> to vector<16xf32>
    %33 = vector.shape_cast %32 : vector<16xf32> to vector<16x1xf32>
    %34 = vector.broadcast %33 : vector<16x1xf32> to vector<16x16xf32>
    %35 = arith.subf %31, %34 : vector<16x16xf32>
    %36 = math.exp %35 : vector<16x16xf32>
    %cst_22 = arith.constant dense<0.000000e+00> : vector<16xf32>
    %37 = vector.multi_reduction <add>, %36, %cst_22 [1] : vector<16x16xf32> to vector<16xf32>
    %38 = vector.shape_cast %37 : vector<16xf32> to vector<16x1xf32>
    %cst_23 = arith.constant 1.000000e+00 : f32
    %39 = vector.broadcast %cst_23 : f32 to vector<16x1xf32>
    %40 = arith.divf %39, %38 : vector<16x1xf32>
    %41 = vector.broadcast %40 : vector<16x1xf32> to vector<16x16xf32>
    %42 = arith.mulf %36, %41 : vector<16x16xf32>
    %cst_24 = arith.constant dense<0.000000e+00> : vector<16x32xf32>
    %43 = tpu.matmul %42, %19, %cst_24 {dimension_numbers = #tpu.dot_dimension_numbers<[1], [0], [0], [1], [0, 0, 1, 1], [], []>} : vector<16x16xf32>, vector<16x32xf32>, vector<16x32xf32> -> vector<16x32xf32>
    %44 = arith.addf %18, %43 : vector<16x32xf32>
    %45 = vector.extract_strided_slice %11 {offsets = [0, 32], sizes = [16, 32], strides = [1, 1]} : vector<16x128xf32> to vector<16x32xf32>
    %46 = vector.extract_strided_slice %15 {offsets = [0, 1], sizes = [16, 1], strides = [1, 1]} : vector<16x4xf32> to vector<16x1xf32>
    %47 = vector.extract_strided_slice %17 {offsets = [1, 0], sizes = [1, 16], strides = [1, 1]} : vector<4x16xf32> to vector<1x16xf32>
    %48 = vector.broadcast %46 : vector<16x1xf32> to vector<16x16xf32>
    %49 = vector.broadcast %47 : vector<1x16xf32> to vector<16x16xf32>
    %50 = arith.addf %48, %49 : vector<16x16xf32>
    %cst_25 = arith.constant 0.000000e+00 : f32
    %51 = vector.broadcast %cst_25 : f32 to vector<16x16xf32>
    %52 = arith.cmpf ogt, %50, %51 : vector<16x16xf32>
    %cst_26 = arith.constant 2.000000e-01 : f32
    %53 = vector.broadcast %cst_26 : f32 to vector<16x16xf32>
    %54 = arith.mulf %53, %50 : vector<16x16xf32>
    %55 = arith.select %52, %50, %54 : vector<16x16xi1>, vector<16x16xf32>
    %cst_27 = arith.constant -1.000000e+30 : f32
    %56 = vector.broadcast %cst_27 : f32 to vector<16x16xf32>
    %57 = arith.select %2, %55, %56 : vector<16x16xi1>, vector<16x16xf32>
    %cst_28 = arith.constant dense<0xFF800000> : vector<16xf32>
    %58 = vector.multi_reduction <maximumf>, %57, %cst_28 [1] : vector<16x16xf32> to vector<16xf32>
    %59 = vector.shape_cast %58 : vector<16xf32> to vector<16x1xf32>
    %60 = vector.broadcast %59 : vector<16x1xf32> to vector<16x16xf32>
    %61 = arith.subf %57, %60 : vector<16x16xf32>
    %62 = math.exp %61 : vector<16x16xf32>
    %cst_29 = arith.constant dense<0.000000e+00> : vector<16xf32>
    %63 = vector.multi_reduction <add>, %62, %cst_29 [1] : vector<16x16xf32> to vector<16xf32>
    %64 = vector.shape_cast %63 : vector<16xf32> to vector<16x1xf32>
    %cst_30 = arith.constant 1.000000e+00 : f32
    %65 = vector.broadcast %cst_30 : f32 to vector<16x1xf32>
    %66 = arith.divf %65, %64 : vector<16x1xf32>
    %67 = vector.broadcast %66 : vector<16x1xf32> to vector<16x16xf32>
    %68 = arith.mulf %62, %67 : vector<16x16xf32>
    %cst_31 = arith.constant dense<0.000000e+00> : vector<16x32xf32>
    %69 = tpu.matmul %68, %45, %cst_31 {dimension_numbers = #tpu.dot_dimension_numbers<[1], [0], [0], [1], [0, 0, 1, 1], [], []>} : vector<16x16xf32>, vector<16x32xf32>, vector<16x32xf32> -> vector<16x32xf32>
    %70 = arith.addf %44, %69 : vector<16x32xf32>
    %71 = vector.extract_strided_slice %11 {offsets = [0, 64], sizes = [16, 32], strides = [1, 1]} : vector<16x128xf32> to vector<16x32xf32>
    %72 = vector.extract_strided_slice %15 {offsets = [0, 2], sizes = [16, 1], strides = [1, 1]} : vector<16x4xf32> to vector<16x1xf32>
    %73 = vector.extract_strided_slice %17 {offsets = [2, 0], sizes = [1, 16], strides = [1, 1]} : vector<4x16xf32> to vector<1x16xf32>
    %74 = vector.broadcast %72 : vector<16x1xf32> to vector<16x16xf32>
    %75 = vector.broadcast %73 : vector<1x16xf32> to vector<16x16xf32>
    %76 = arith.addf %74, %75 : vector<16x16xf32>
    %cst_32 = arith.constant 0.000000e+00 : f32
    %77 = vector.broadcast %cst_32 : f32 to vector<16x16xf32>
    %78 = arith.cmpf ogt, %76, %77 : vector<16x16xf32>
    %cst_33 = arith.constant 2.000000e-01 : f32
    %79 = vector.broadcast %cst_33 : f32 to vector<16x16xf32>
    %80 = arith.mulf %79, %76 : vector<16x16xf32>
    %81 = arith.select %78, %76, %80 : vector<16x16xi1>, vector<16x16xf32>
    %cst_34 = arith.constant -1.000000e+30 : f32
    %82 = vector.broadcast %cst_34 : f32 to vector<16x16xf32>
    %83 = arith.select %2, %81, %82 : vector<16x16xi1>, vector<16x16xf32>
    %cst_35 = arith.constant dense<0xFF800000> : vector<16xf32>
    %84 = vector.multi_reduction <maximumf>, %83, %cst_35 [1] : vector<16x16xf32> to vector<16xf32>
    %85 = vector.shape_cast %84 : vector<16xf32> to vector<16x1xf32>
    %86 = vector.broadcast %85 : vector<16x1xf32> to vector<16x16xf32>
    %87 = arith.subf %83, %86 : vector<16x16xf32>
    %88 = math.exp %87 : vector<16x16xf32>
    %cst_36 = arith.constant dense<0.000000e+00> : vector<16xf32>
    %89 = vector.multi_reduction <add>, %88, %cst_36 [1] : vector<16x16xf32> to vector<16xf32>
    %90 = vector.shape_cast %89 : vector<16xf32> to vector<16x1xf32>
    %cst_37 = arith.constant 1.000000e+00 : f32
    %91 = vector.broadcast %cst_37 : f32 to vector<16x1xf32>
    %92 = arith.divf %91, %90 : vector<16x1xf32>
    %93 = vector.broadcast %92 : vector<16x1xf32> to vector<16x16xf32>
    %94 = arith.mulf %88, %93 : vector<16x16xf32>
    %cst_38 = arith.constant dense<0.000000e+00> : vector<16x32xf32>
    %95 = tpu.matmul %94, %71, %cst_38 {dimension_numbers = #tpu.dot_dimension_numbers<[1], [0], [0], [1], [0, 0, 1, 1], [], []>} : vector<16x16xf32>, vector<16x32xf32>, vector<16x32xf32> -> vector<16x32xf32>
    %96 = arith.addf %70, %95 : vector<16x32xf32>
    %97 = vector.extract_strided_slice %11 {offsets = [0, 96], sizes = [16, 32], strides = [1, 1]} : vector<16x128xf32> to vector<16x32xf32>
    %98 = vector.extract_strided_slice %15 {offsets = [0, 3], sizes = [16, 1], strides = [1, 1]} : vector<16x4xf32> to vector<16x1xf32>
    %99 = vector.extract_strided_slice %17 {offsets = [3, 0], sizes = [1, 16], strides = [1, 1]} : vector<4x16xf32> to vector<1x16xf32>
    %100 = vector.broadcast %98 : vector<16x1xf32> to vector<16x16xf32>
    %101 = vector.broadcast %99 : vector<1x16xf32> to vector<16x16xf32>
    %102 = arith.addf %100, %101 : vector<16x16xf32>
    %cst_39 = arith.constant 0.000000e+00 : f32
    %103 = vector.broadcast %cst_39 : f32 to vector<16x16xf32>
    %104 = arith.cmpf ogt, %102, %103 : vector<16x16xf32>
    %cst_40 = arith.constant 2.000000e-01 : f32
    %105 = vector.broadcast %cst_40 : f32 to vector<16x16xf32>
    %106 = arith.mulf %105, %102 : vector<16x16xf32>
    %107 = arith.select %104, %102, %106 : vector<16x16xi1>, vector<16x16xf32>
    %cst_41 = arith.constant -1.000000e+30 : f32
    %108 = vector.broadcast %cst_41 : f32 to vector<16x16xf32>
    %109 = arith.select %2, %107, %108 : vector<16x16xi1>, vector<16x16xf32>
    %cst_42 = arith.constant dense<0xFF800000> : vector<16xf32>
    %110 = vector.multi_reduction <maximumf>, %109, %cst_42 [1] : vector<16x16xf32> to vector<16xf32>
    %111 = vector.shape_cast %110 : vector<16xf32> to vector<16x1xf32>
    %112 = vector.broadcast %111 : vector<16x1xf32> to vector<16x16xf32>
    %113 = arith.subf %109, %112 : vector<16x16xf32>
    %114 = math.exp %113 : vector<16x16xf32>
    %cst_43 = arith.constant dense<0.000000e+00> : vector<16xf32>
    %115 = vector.multi_reduction <add>, %114, %cst_43 [1] : vector<16x16xf32> to vector<16xf32>
    %116 = vector.shape_cast %115 : vector<16xf32> to vector<16x1xf32>
    %cst_44 = arith.constant 1.000000e+00 : f32
    %117 = vector.broadcast %cst_44 : f32 to vector<16x1xf32>
    %118 = arith.divf %117, %116 : vector<16x1xf32>
    %119 = vector.broadcast %118 : vector<16x1xf32> to vector<16x16xf32>
    %120 = arith.mulf %114, %119 : vector<16x16xf32>
    %cst_45 = arith.constant dense<0.000000e+00> : vector<16x32xf32>
    %121 = tpu.matmul %120, %97, %cst_45 {dimension_numbers = #tpu.dot_dimension_numbers<[1], [0], [0], [1], [0, 0, 1, 1], [], []>} : vector<16x16xf32>, vector<16x32xf32>, vector<16x32xf32> -> vector<16x32xf32>
    %122 = arith.addf %96, %121 : vector<16x32xf32>
    %cst_46 = arith.constant 2.500000e-01 : f32
    %123 = vector.broadcast %cst_46 : f32 to vector<16x32xf32>
    %124 = arith.mulf %122, %123 : vector<16x32xf32>
    %c1 = arith.constant 1 : index
    %c0_47 = arith.constant 0 : index
    %125 = vector.load %arg6[%c1, %c0_47] : memref<8x32xf32, #tpu.memory_space<vmem>>, vector<1x32xf32>
    %126 = vector.broadcast %125 : vector<1x32xf32> to vector<16x32xf32>
    %127 = arith.addf %124, %126 : vector<16x32xf32>
    %cst_48 = arith.constant 0.000000e+00 : f32
    %128 = vector.broadcast %cst_48 : f32 to vector<16x32xf32>
    %129 = arith.cmpf ogt, %127, %128 : vector<16x32xf32>
    %cst_49 = arith.constant 0.000000e+00 : f32
    %130 = vector.broadcast %cst_49 : f32 to vector<16x32xf32>
    %131 = arith.minimumf %127, %130 : vector<16x32xf32>
    %132 = math.exp %131 : vector<16x32xf32>
    %cst_50 = arith.constant 1.000000e+00 : f32
    %133 = vector.broadcast %cst_50 : f32 to vector<16x32xf32>
    %134 = arith.subf %132, %133 : vector<16x32xf32>
    %135 = arith.select %129, %127, %134 : vector<16x32xi1>, vector<16x32xf32>
    %136 = arith.addf %135, %8 : vector<16x32xf32>
    %c1_51 = arith.constant 1 : index
    %c0_52 = arith.constant 0 : index
    %c0_53 = arith.constant 0 : index
    %137 = vector.load %arg4[%c1_51, %c0_52, %c0_53] : memref<3x32x128xf32, #tpu.memory_space<vmem>>, vector<1x32x128xf32>
    %138 = vector.shape_cast %137 : vector<1x32x128xf32> to vector<32x128xf32>
    %cst_54 = arith.constant dense<0.000000e+00> : vector<16x128xf32>
    %139 = tpu.matmul %136, %138, %cst_54 {dimension_numbers = #tpu.dot_dimension_numbers<[1], [0], [0], [1], [0, 0, 1, 1], [], []>} : vector<16x32xf32>, vector<32x128xf32>, vector<16x128xf32> -> vector<16x128xf32>
    %c1_55 = arith.constant 1 : index
    %c0_56 = arith.constant 0 : index
    %c0_57 = arith.constant 0 : index
    %140 = vector.load %arg5[%c1_55, %c0_56, %c0_57] : memref<3x8x128xf32, #tpu.memory_space<vmem>>, vector<1x8x128xf32>
    %141 = vector.shape_cast %140 : vector<1x8x128xf32> to vector<8x128xf32>
    %142 = vector.extract_strided_slice %141 {offsets = [0, 0], sizes = [4, 128], strides = [1, 1]} : vector<8x128xf32> to vector<4x128xf32>
    %cst_58 = arith.constant dense<0.000000e+00> : vector<16x4xf32>
    %143 = tpu.matmul %139, %142, %cst_58 {dimension_numbers = #tpu.dot_dimension_numbers<[1], [1], [0], [0], [0, 0, 1, 0], [], []>} : vector<16x128xf32>, vector<4x128xf32>, vector<16x4xf32> -> vector<16x4xf32>
    %144 = vector.extract_strided_slice %141 {offsets = [4, 0], sizes = [4, 128], strides = [1, 1]} : vector<8x128xf32> to vector<4x128xf32>
    %cst_59 = arith.constant dense<0.000000e+00> : vector<4x16xf32>
    %145 = tpu.matmul %144, %139, %cst_59 {dimension_numbers = #tpu.dot_dimension_numbers<[1], [1], [0], [0], [0, 0, 1, 0], [], []>} : vector<4x128xf32>, vector<16x128xf32>, vector<4x16xf32> -> vector<4x16xf32>
    %cst_60 = arith.constant 0.000000e+00 : f32
    %146 = vector.broadcast %cst_60 : f32 to vector<16x32xf32>
    %147 = vector.extract_strided_slice %139 {offsets = [0, 0], sizes = [16, 32], strides = [1, 1]} : vector<16x128xf32> to vector<16x32xf32>
    %148 = vector.extract_strided_slice %143 {offsets = [0, 0], sizes = [16, 1], strides = [1, 1]} : vector<16x4xf32> to vector<16x1xf32>
    %149 = vector.extract_strided_slice %145 {offsets = [0, 0], sizes = [1, 16], strides = [1, 1]} : vector<4x16xf32> to vector<1x16xf32>
    %150 = vector.broadcast %148 : vector<16x1xf32> to vector<16x16xf32>
    %151 = vector.broadcast %149 : vector<1x16xf32> to vector<16x16xf32>
    %152 = arith.addf %150, %151 : vector<16x16xf32>
    %cst_61 = arith.constant 0.000000e+00 : f32
    %153 = vector.broadcast %cst_61 : f32 to vector<16x16xf32>
    %154 = arith.cmpf ogt, %152, %153 : vector<16x16xf32>
    %cst_62 = arith.constant 2.000000e-01 : f32
    %155 = vector.broadcast %cst_62 : f32 to vector<16x16xf32>
    %156 = arith.mulf %155, %152 : vector<16x16xf32>
    %157 = arith.select %154, %152, %156 : vector<16x16xi1>, vector<16x16xf32>
    %cst_63 = arith.constant -1.000000e+30 : f32
    %158 = vector.broadcast %cst_63 : f32 to vector<16x16xf32>
    %159 = arith.select %2, %157, %158 : vector<16x16xi1>, vector<16x16xf32>
    %cst_64 = arith.constant dense<0xFF800000> : vector<16xf32>
    %160 = vector.multi_reduction <maximumf>, %159, %cst_64 [1] : vector<16x16xf32> to vector<16xf32>
    %161 = vector.shape_cast %160 : vector<16xf32> to vector<16x1xf32>
    %162 = vector.broadcast %161 : vector<16x1xf32> to vector<16x16xf32>
    %163 = arith.subf %159, %162 : vector<16x16xf32>
    %164 = math.exp %163 : vector<16x16xf32>
    %cst_65 = arith.constant dense<0.000000e+00> : vector<16xf32>
    %165 = vector.multi_reduction <add>, %164, %cst_65 [1] : vector<16x16xf32> to vector<16xf32>
    %166 = vector.shape_cast %165 : vector<16xf32> to vector<16x1xf32>
    %cst_66 = arith.constant 1.000000e+00 : f32
    %167 = vector.broadcast %cst_66 : f32 to vector<16x1xf32>
    %168 = arith.divf %167, %166 : vector<16x1xf32>
    %169 = vector.broadcast %168 : vector<16x1xf32> to vector<16x16xf32>
    %170 = arith.mulf %164, %169 : vector<16x16xf32>
    %cst_67 = arith.constant dense<0.000000e+00> : vector<16x32xf32>
    %171 = tpu.matmul %170, %147, %cst_67 {dimension_numbers = #tpu.dot_dimension_numbers<[1], [0], [0], [1], [0, 0, 1, 1], [], []>} : vector<16x16xf32>, vector<16x32xf32>, vector<16x32xf32> -> vector<16x32xf32>
    %172 = arith.addf %146, %171 : vector<16x32xf32>
    %173 = vector.extract_strided_slice %139 {offsets = [0, 32], sizes = [16, 32], strides = [1, 1]} : vector<16x128xf32> to vector<16x32xf32>
    %174 = vector.extract_strided_slice %143 {offsets = [0, 1], sizes = [16, 1], strides = [1, 1]} : vector<16x4xf32> to vector<16x1xf32>
    %175 = vector.extract_strided_slice %145 {offsets = [1, 0], sizes = [1, 16], strides = [1, 1]} : vector<4x16xf32> to vector<1x16xf32>
    %176 = vector.broadcast %174 : vector<16x1xf32> to vector<16x16xf32>
    %177 = vector.broadcast %175 : vector<1x16xf32> to vector<16x16xf32>
    %178 = arith.addf %176, %177 : vector<16x16xf32>
    %cst_68 = arith.constant 0.000000e+00 : f32
    %179 = vector.broadcast %cst_68 : f32 to vector<16x16xf32>
    %180 = arith.cmpf ogt, %178, %179 : vector<16x16xf32>
    %cst_69 = arith.constant 2.000000e-01 : f32
    %181 = vector.broadcast %cst_69 : f32 to vector<16x16xf32>
    %182 = arith.mulf %181, %178 : vector<16x16xf32>
    %183 = arith.select %180, %178, %182 : vector<16x16xi1>, vector<16x16xf32>
    %cst_70 = arith.constant -1.000000e+30 : f32
    %184 = vector.broadcast %cst_70 : f32 to vector<16x16xf32>
    %185 = arith.select %2, %183, %184 : vector<16x16xi1>, vector<16x16xf32>
    %cst_71 = arith.constant dense<0xFF800000> : vector<16xf32>
    %186 = vector.multi_reduction <maximumf>, %185, %cst_71 [1] : vector<16x16xf32> to vector<16xf32>
    %187 = vector.shape_cast %186 : vector<16xf32> to vector<16x1xf32>
    %188 = vector.broadcast %187 : vector<16x1xf32> to vector<16x16xf32>
    %189 = arith.subf %185, %188 : vector<16x16xf32>
    %190 = math.exp %189 : vector<16x16xf32>
    %cst_72 = arith.constant dense<0.000000e+00> : vector<16xf32>
    %191 = vector.multi_reduction <add>, %190, %cst_72 [1] : vector<16x16xf32> to vector<16xf32>
    %192 = vector.shape_cast %191 : vector<16xf32> to vector<16x1xf32>
    %cst_73 = arith.constant 1.000000e+00 : f32
    %193 = vector.broadcast %cst_73 : f32 to vector<16x1xf32>
    %194 = arith.divf %193, %192 : vector<16x1xf32>
    %195 = vector.broadcast %194 : vector<16x1xf32> to vector<16x16xf32>
    %196 = arith.mulf %190, %195 : vector<16x16xf32>
    %cst_74 = arith.constant dense<0.000000e+00> : vector<16x32xf32>
    %197 = tpu.matmul %196, %173, %cst_74 {dimension_numbers = #tpu.dot_dimension_numbers<[1], [0], [0], [1], [0, 0, 1, 1], [], []>} : vector<16x16xf32>, vector<16x32xf32>, vector<16x32xf32> -> vector<16x32xf32>
    %198 = arith.addf %172, %197 : vector<16x32xf32>
    %199 = vector.extract_strided_slice %139 {offsets = [0, 64], sizes = [16, 32], strides = [1, 1]} : vector<16x128xf32> to vector<16x32xf32>
    %200 = vector.extract_strided_slice %143 {offsets = [0, 2], sizes = [16, 1], strides = [1, 1]} : vector<16x4xf32> to vector<16x1xf32>
    %201 = vector.extract_strided_slice %145 {offsets = [2, 0], sizes = [1, 16], strides = [1, 1]} : vector<4x16xf32> to vector<1x16xf32>
    %202 = vector.broadcast %200 : vector<16x1xf32> to vector<16x16xf32>
    %203 = vector.broadcast %201 : vector<1x16xf32> to vector<16x16xf32>
    %204 = arith.addf %202, %203 : vector<16x16xf32>
    %cst_75 = arith.constant 0.000000e+00 : f32
    %205 = vector.broadcast %cst_75 : f32 to vector<16x16xf32>
    %206 = arith.cmpf ogt, %204, %205 : vector<16x16xf32>
    %cst_76 = arith.constant 2.000000e-01 : f32
    %207 = vector.broadcast %cst_76 : f32 to vector<16x16xf32>
    %208 = arith.mulf %207, %204 : vector<16x16xf32>
    %209 = arith.select %206, %204, %208 : vector<16x16xi1>, vector<16x16xf32>
    %cst_77 = arith.constant -1.000000e+30 : f32
    %210 = vector.broadcast %cst_77 : f32 to vector<16x16xf32>
    %211 = arith.select %2, %209, %210 : vector<16x16xi1>, vector<16x16xf32>
    %cst_78 = arith.constant dense<0xFF800000> : vector<16xf32>
    %212 = vector.multi_reduction <maximumf>, %211, %cst_78 [1] : vector<16x16xf32> to vector<16xf32>
    %213 = vector.shape_cast %212 : vector<16xf32> to vector<16x1xf32>
    %214 = vector.broadcast %213 : vector<16x1xf32> to vector<16x16xf32>
    %215 = arith.subf %211, %214 : vector<16x16xf32>
    %216 = math.exp %215 : vector<16x16xf32>
    %cst_79 = arith.constant dense<0.000000e+00> : vector<16xf32>
    %217 = vector.multi_reduction <add>, %216, %cst_79 [1] : vector<16x16xf32> to vector<16xf32>
    %218 = vector.shape_cast %217 : vector<16xf32> to vector<16x1xf32>
    %cst_80 = arith.constant 1.000000e+00 : f32
    %219 = vector.broadcast %cst_80 : f32 to vector<16x1xf32>
    %220 = arith.divf %219, %218 : vector<16x1xf32>
    %221 = vector.broadcast %220 : vector<16x1xf32> to vector<16x16xf32>
    %222 = arith.mulf %216, %221 : vector<16x16xf32>
    %cst_81 = arith.constant dense<0.000000e+00> : vector<16x32xf32>
    %223 = tpu.matmul %222, %199, %cst_81 {dimension_numbers = #tpu.dot_dimension_numbers<[1], [0], [0], [1], [0, 0, 1, 1], [], []>} : vector<16x16xf32>, vector<16x32xf32>, vector<16x32xf32> -> vector<16x32xf32>
    %224 = arith.addf %198, %223 : vector<16x32xf32>
    %225 = vector.extract_strided_slice %139 {offsets = [0, 96], sizes = [16, 32], strides = [1, 1]} : vector<16x128xf32> to vector<16x32xf32>
    %226 = vector.extract_strided_slice %143 {offsets = [0, 3], sizes = [16, 1], strides = [1, 1]} : vector<16x4xf32> to vector<16x1xf32>
    %227 = vector.extract_strided_slice %145 {offsets = [3, 0], sizes = [1, 16], strides = [1, 1]} : vector<4x16xf32> to vector<1x16xf32>
    %228 = vector.broadcast %226 : vector<16x1xf32> to vector<16x16xf32>
    %229 = vector.broadcast %227 : vector<1x16xf32> to vector<16x16xf32>
    %230 = arith.addf %228, %229 : vector<16x16xf32>
    %cst_82 = arith.constant 0.000000e+00 : f32
    %231 = vector.broadcast %cst_82 : f32 to vector<16x16xf32>
    %232 = arith.cmpf ogt, %230, %231 : vector<16x16xf32>
    %cst_83 = arith.constant 2.000000e-01 : f32
    %233 = vector.broadcast %cst_83 : f32 to vector<16x16xf32>
    %234 = arith.mulf %233, %230 : vector<16x16xf32>
    %235 = arith.select %232, %230, %234 : vector<16x16xi1>, vector<16x16xf32>
    %cst_84 = arith.constant -1.000000e+30 : f32
    %236 = vector.broadcast %cst_84 : f32 to vector<16x16xf32>
    %237 = arith.select %2, %235, %236 : vector<16x16xi1>, vector<16x16xf32>
    %cst_85 = arith.constant dense<0xFF800000> : vector<16xf32>
    %238 = vector.multi_reduction <maximumf>, %237, %cst_85 [1] : vector<16x16xf32> to vector<16xf32>
    %239 = vector.shape_cast %238 : vector<16xf32> to vector<16x1xf32>
    %240 = vector.broadcast %239 : vector<16x1xf32> to vector<16x16xf32>
    %241 = arith.subf %237, %240 : vector<16x16xf32>
    %242 = math.exp %241 : vector<16x16xf32>
    %cst_86 = arith.constant dense<0.000000e+00> : vector<16xf32>
    %243 = vector.multi_reduction <add>, %242, %cst_86 [1] : vector<16x16xf32> to vector<16xf32>
    %244 = vector.shape_cast %243 : vector<16xf32> to vector<16x1xf32>
    %cst_87 = arith.constant 1.000000e+00 : f32
    %245 = vector.broadcast %cst_87 : f32 to vector<16x1xf32>
    %246 = arith.divf %245, %244 : vector<16x1xf32>
    %247 = vector.broadcast %246 : vector<16x1xf32> to vector<16x16xf32>
    %248 = arith.mulf %242, %247 : vector<16x16xf32>
    %cst_88 = arith.constant dense<0.000000e+00> : vector<16x32xf32>
    %249 = tpu.matmul %248, %225, %cst_88 {dimension_numbers = #tpu.dot_dimension_numbers<[1], [0], [0], [1], [0, 0, 1, 1], [], []>} : vector<16x16xf32>, vector<16x32xf32>, vector<16x32xf32> -> vector<16x32xf32>
    %250 = arith.addf %224, %249 : vector<16x32xf32>
    %cst_89 = arith.constant 2.500000e-01 : f32
    %251 = vector.broadcast %cst_89 : f32 to vector<16x32xf32>
    %252 = arith.mulf %250, %251 : vector<16x32xf32>
    %c2 = arith.constant 2 : index
    %c0_90 = arith.constant 0 : index
    %253 = vector.load %arg6[%c2, %c0_90] : memref<8x32xf32, #tpu.memory_space<vmem>>, vector<1x32xf32>
    %254 = vector.broadcast %253 : vector<1x32xf32> to vector<16x32xf32>
    %255 = arith.addf %252, %254 : vector<16x32xf32>
    %cst_91 = arith.constant 0.000000e+00 : f32
    %256 = vector.broadcast %cst_91 : f32 to vector<16x32xf32>
    %257 = arith.cmpf ogt, %255, %256 : vector<16x32xf32>
    %cst_92 = arith.constant 0.000000e+00 : f32
    %258 = vector.broadcast %cst_92 : f32 to vector<16x32xf32>
    %259 = arith.minimumf %255, %258 : vector<16x32xf32>
    %260 = math.exp %259 : vector<16x32xf32>
    %cst_93 = arith.constant 1.000000e+00 : f32
    %261 = vector.broadcast %cst_93 : f32 to vector<16x32xf32>
    %262 = arith.subf %260, %261 : vector<16x32xf32>
    %263 = arith.select %257, %255, %262 : vector<16x32xi1>, vector<16x32xf32>
    %264 = arith.addf %263, %136 : vector<16x32xf32>
    %c2_94 = arith.constant 2 : index
    %c0_95 = arith.constant 0 : index
    %c0_96 = arith.constant 0 : index
    %265 = vector.load %arg4[%c2_94, %c0_95, %c0_96] : memref<3x32x128xf32, #tpu.memory_space<vmem>>, vector<1x32x128xf32>
    %266 = vector.shape_cast %265 : vector<1x32x128xf32> to vector<32x128xf32>
    %cst_97 = arith.constant dense<0.000000e+00> : vector<16x128xf32>
    %267 = tpu.matmul %264, %266, %cst_97 {dimension_numbers = #tpu.dot_dimension_numbers<[1], [0], [0], [1], [0, 0, 1, 1], [], []>} : vector<16x32xf32>, vector<32x128xf32>, vector<16x128xf32> -> vector<16x128xf32>
    %c2_98 = arith.constant 2 : index
    %c0_99 = arith.constant 0 : index
    %c0_100 = arith.constant 0 : index
    %268 = vector.load %arg5[%c2_98, %c0_99, %c0_100] : memref<3x8x128xf32, #tpu.memory_space<vmem>>, vector<1x8x128xf32>
    %269 = vector.shape_cast %268 : vector<1x8x128xf32> to vector<8x128xf32>
    %270 = vector.extract_strided_slice %269 {offsets = [0, 0], sizes = [4, 128], strides = [1, 1]} : vector<8x128xf32> to vector<4x128xf32>
    %cst_101 = arith.constant dense<0.000000e+00> : vector<16x4xf32>
    %271 = tpu.matmul %267, %270, %cst_101 {dimension_numbers = #tpu.dot_dimension_numbers<[1], [1], [0], [0], [0, 0, 1, 0], [], []>} : vector<16x128xf32>, vector<4x128xf32>, vector<16x4xf32> -> vector<16x4xf32>
    %272 = vector.extract_strided_slice %269 {offsets = [4, 0], sizes = [4, 128], strides = [1, 1]} : vector<8x128xf32> to vector<4x128xf32>
    %cst_102 = arith.constant dense<0.000000e+00> : vector<4x16xf32>
    %273 = tpu.matmul %272, %267, %cst_102 {dimension_numbers = #tpu.dot_dimension_numbers<[1], [1], [0], [0], [0, 0, 1, 0], [], []>} : vector<4x128xf32>, vector<16x128xf32>, vector<4x16xf32> -> vector<4x16xf32>
    %cst_103 = arith.constant 0.000000e+00 : f32
    %274 = vector.broadcast %cst_103 : f32 to vector<16x32xf32>
    %275 = vector.extract_strided_slice %267 {offsets = [0, 0], sizes = [16, 32], strides = [1, 1]} : vector<16x128xf32> to vector<16x32xf32>
    %276 = vector.extract_strided_slice %271 {offsets = [0, 0], sizes = [16, 1], strides = [1, 1]} : vector<16x4xf32> to vector<16x1xf32>
    %277 = vector.extract_strided_slice %273 {offsets = [0, 0], sizes = [1, 16], strides = [1, 1]} : vector<4x16xf32> to vector<1x16xf32>
    %278 = vector.broadcast %276 : vector<16x1xf32> to vector<16x16xf32>
    %279 = vector.broadcast %277 : vector<1x16xf32> to vector<16x16xf32>
    %280 = arith.addf %278, %279 : vector<16x16xf32>
    %cst_104 = arith.constant 0.000000e+00 : f32
    %281 = vector.broadcast %cst_104 : f32 to vector<16x16xf32>
    %282 = arith.cmpf ogt, %280, %281 : vector<16x16xf32>
    %cst_105 = arith.constant 2.000000e-01 : f32
    %283 = vector.broadcast %cst_105 : f32 to vector<16x16xf32>
    %284 = arith.mulf %283, %280 : vector<16x16xf32>
    %285 = arith.select %282, %280, %284 : vector<16x16xi1>, vector<16x16xf32>
    %cst_106 = arith.constant -1.000000e+30 : f32
    %286 = vector.broadcast %cst_106 : f32 to vector<16x16xf32>
    %287 = arith.select %2, %285, %286 : vector<16x16xi1>, vector<16x16xf32>
    %cst_107 = arith.constant dense<0xFF800000> : vector<16xf32>
    %288 = vector.multi_reduction <maximumf>, %287, %cst_107 [1] : vector<16x16xf32> to vector<16xf32>
    %289 = vector.shape_cast %288 : vector<16xf32> to vector<16x1xf32>
    %290 = vector.broadcast %289 : vector<16x1xf32> to vector<16x16xf32>
    %291 = arith.subf %287, %290 : vector<16x16xf32>
    %292 = math.exp %291 : vector<16x16xf32>
    %cst_108 = arith.constant dense<0.000000e+00> : vector<16xf32>
    %293 = vector.multi_reduction <add>, %292, %cst_108 [1] : vector<16x16xf32> to vector<16xf32>
    %294 = vector.shape_cast %293 : vector<16xf32> to vector<16x1xf32>
    %cst_109 = arith.constant 1.000000e+00 : f32
    %295 = vector.broadcast %cst_109 : f32 to vector<16x1xf32>
    %296 = arith.divf %295, %294 : vector<16x1xf32>
    %297 = vector.broadcast %296 : vector<16x1xf32> to vector<16x16xf32>
    %298 = arith.mulf %292, %297 : vector<16x16xf32>
    %cst_110 = arith.constant dense<0.000000e+00> : vector<16x32xf32>
    %299 = tpu.matmul %298, %275, %cst_110 {dimension_numbers = #tpu.dot_dimension_numbers<[1], [0], [0], [1], [0, 0, 1, 1], [], []>} : vector<16x16xf32>, vector<16x32xf32>, vector<16x32xf32> -> vector<16x32xf32>
    %300 = arith.addf %274, %299 : vector<16x32xf32>
    %301 = vector.extract_strided_slice %267 {offsets = [0, 32], sizes = [16, 32], strides = [1, 1]} : vector<16x128xf32> to vector<16x32xf32>
    %302 = vector.extract_strided_slice %271 {offsets = [0, 1], sizes = [16, 1], strides = [1, 1]} : vector<16x4xf32> to vector<16x1xf32>
    %303 = vector.extract_strided_slice %273 {offsets = [1, 0], sizes = [1, 16], strides = [1, 1]} : vector<4x16xf32> to vector<1x16xf32>
    %304 = vector.broadcast %302 : vector<16x1xf32> to vector<16x16xf32>
    %305 = vector.broadcast %303 : vector<1x16xf32> to vector<16x16xf32>
    %306 = arith.addf %304, %305 : vector<16x16xf32>
    %cst_111 = arith.constant 0.000000e+00 : f32
    %307 = vector.broadcast %cst_111 : f32 to vector<16x16xf32>
    %308 = arith.cmpf ogt, %306, %307 : vector<16x16xf32>
    %cst_112 = arith.constant 2.000000e-01 : f32
    %309 = vector.broadcast %cst_112 : f32 to vector<16x16xf32>
    %310 = arith.mulf %309, %306 : vector<16x16xf32>
    %311 = arith.select %308, %306, %310 : vector<16x16xi1>, vector<16x16xf32>
    %cst_113 = arith.constant -1.000000e+30 : f32
    %312 = vector.broadcast %cst_113 : f32 to vector<16x16xf32>
    %313 = arith.select %2, %311, %312 : vector<16x16xi1>, vector<16x16xf32>
    %cst_114 = arith.constant dense<0xFF800000> : vector<16xf32>
    %314 = vector.multi_reduction <maximumf>, %313, %cst_114 [1] : vector<16x16xf32> to vector<16xf32>
    %315 = vector.shape_cast %314 : vector<16xf32> to vector<16x1xf32>
    %316 = vector.broadcast %315 : vector<16x1xf32> to vector<16x16xf32>
    %317 = arith.subf %313, %316 : vector<16x16xf32>
    %318 = math.exp %317 : vector<16x16xf32>
    %cst_115 = arith.constant dense<0.000000e+00> : vector<16xf32>
    %319 = vector.multi_reduction <add>, %318, %cst_115 [1] : vector<16x16xf32> to vector<16xf32>
    %320 = vector.shape_cast %319 : vector<16xf32> to vector<16x1xf32>
    %cst_116 = arith.constant 1.000000e+00 : f32
    %321 = vector.broadcast %cst_116 : f32 to vector<16x1xf32>
    %322 = arith.divf %321, %320 : vector<16x1xf32>
    %323 = vector.broadcast %322 : vector<16x1xf32> to vector<16x16xf32>
    %324 = arith.mulf %318, %323 : vector<16x16xf32>
    %cst_117 = arith.constant dense<0.000000e+00> : vector<16x32xf32>
    %325 = tpu.matmul %324, %301, %cst_117 {dimension_numbers = #tpu.dot_dimension_numbers<[1], [0], [0], [1], [0, 0, 1, 1], [], []>} : vector<16x16xf32>, vector<16x32xf32>, vector<16x32xf32> -> vector<16x32xf32>
    %326 = arith.addf %300, %325 : vector<16x32xf32>
    %327 = vector.extract_strided_slice %267 {offsets = [0, 64], sizes = [16, 32], strides = [1, 1]} : vector<16x128xf32> to vector<16x32xf32>
    %328 = vector.extract_strided_slice %271 {offsets = [0, 2], sizes = [16, 1], strides = [1, 1]} : vector<16x4xf32> to vector<16x1xf32>
    %329 = vector.extract_strided_slice %273 {offsets = [2, 0], sizes = [1, 16], strides = [1, 1]} : vector<4x16xf32> to vector<1x16xf32>
    %330 = vector.broadcast %328 : vector<16x1xf32> to vector<16x16xf32>
    %331 = vector.broadcast %329 : vector<1x16xf32> to vector<16x16xf32>
    %332 = arith.addf %330, %331 : vector<16x16xf32>
    %cst_118 = arith.constant 0.000000e+00 : f32
    %333 = vector.broadcast %cst_118 : f32 to vector<16x16xf32>
    %334 = arith.cmpf ogt, %332, %333 : vector<16x16xf32>
    %cst_119 = arith.constant 2.000000e-01 : f32
    %335 = vector.broadcast %cst_119 : f32 to vector<16x16xf32>
    %336 = arith.mulf %335, %332 : vector<16x16xf32>
    %337 = arith.select %334, %332, %336 : vector<16x16xi1>, vector<16x16xf32>
    %cst_120 = arith.constant -1.000000e+30 : f32
    %338 = vector.broadcast %cst_120 : f32 to vector<16x16xf32>
    %339 = arith.select %2, %337, %338 : vector<16x16xi1>, vector<16x16xf32>
    %cst_121 = arith.constant dense<0xFF800000> : vector<16xf32>
    %340 = vector.multi_reduction <maximumf>, %339, %cst_121 [1] : vector<16x16xf32> to vector<16xf32>
    %341 = vector.shape_cast %340 : vector<16xf32> to vector<16x1xf32>
    %342 = vector.broadcast %341 : vector<16x1xf32> to vector<16x16xf32>
    %343 = arith.subf %339, %342 : vector<16x16xf32>
    %344 = math.exp %343 : vector<16x16xf32>
    %cst_122 = arith.constant dense<0.000000e+00> : vector<16xf32>
    %345 = vector.multi_reduction <add>, %344, %cst_122 [1] : vector<16x16xf32> to vector<16xf32>
    %346 = vector.shape_cast %345 : vector<16xf32> to vector<16x1xf32>
    %cst_123 = arith.constant 1.000000e+00 : f32
    %347 = vector.broadcast %cst_123 : f32 to vector<16x1xf32>
    %348 = arith.divf %347, %346 : vector<16x1xf32>
    %349 = vector.broadcast %348 : vector<16x1xf32> to vector<16x16xf32>
    %350 = arith.mulf %344, %349 : vector<16x16xf32>
    %cst_124 = arith.constant dense<0.000000e+00> : vector<16x32xf32>
    %351 = tpu.matmul %350, %327, %cst_124 {dimension_numbers = #tpu.dot_dimension_numbers<[1], [0], [0], [1], [0, 0, 1, 1], [], []>} : vector<16x16xf32>, vector<16x32xf32>, vector<16x32xf32> -> vector<16x32xf32>
    %352 = arith.addf %326, %351 : vector<16x32xf32>
    %353 = vector.extract_strided_slice %267 {offsets = [0, 96], sizes = [16, 32], strides = [1, 1]} : vector<16x128xf32> to vector<16x32xf32>
    %354 = vector.extract_strided_slice %271 {offsets = [0, 3], sizes = [16, 1], strides = [1, 1]} : vector<16x4xf32> to vector<16x1xf32>
    %355 = vector.extract_strided_slice %273 {offsets = [3, 0], sizes = [1, 16], strides = [1, 1]} : vector<4x16xf32> to vector<1x16xf32>
    %356 = vector.broadcast %354 : vector<16x1xf32> to vector<16x16xf32>
    %357 = vector.broadcast %355 : vector<1x16xf32> to vector<16x16xf32>
    %358 = arith.addf %356, %357 : vector<16x16xf32>
    %cst_125 = arith.constant 0.000000e+00 : f32
    %359 = vector.broadcast %cst_125 : f32 to vector<16x16xf32>
    %360 = arith.cmpf ogt, %358, %359 : vector<16x16xf32>
    %cst_126 = arith.constant 2.000000e-01 : f32
    %361 = vector.broadcast %cst_126 : f32 to vector<16x16xf32>
    %362 = arith.mulf %361, %358 : vector<16x16xf32>
    %363 = arith.select %360, %358, %362 : vector<16x16xi1>, vector<16x16xf32>
    %cst_127 = arith.constant -1.000000e+30 : f32
    %364 = vector.broadcast %cst_127 : f32 to vector<16x16xf32>
    %365 = arith.select %2, %363, %364 : vector<16x16xi1>, vector<16x16xf32>
    %cst_128 = arith.constant dense<0xFF800000> : vector<16xf32>
    %366 = vector.multi_reduction <maximumf>, %365, %cst_128 [1] : vector<16x16xf32> to vector<16xf32>
    %367 = vector.shape_cast %366 : vector<16xf32> to vector<16x1xf32>
    %368 = vector.broadcast %367 : vector<16x1xf32> to vector<16x16xf32>
    %369 = arith.subf %365, %368 : vector<16x16xf32>
    %370 = math.exp %369 : vector<16x16xf32>
    %cst_129 = arith.constant dense<0.000000e+00> : vector<16xf32>
    %371 = vector.multi_reduction <add>, %370, %cst_129 [1] : vector<16x16xf32> to vector<16xf32>
    %372 = vector.shape_cast %371 : vector<16xf32> to vector<16x1xf32>
    %cst_130 = arith.constant 1.000000e+00 : f32
    %373 = vector.broadcast %cst_130 : f32 to vector<16x1xf32>
    %374 = arith.divf %373, %372 : vector<16x1xf32>
    %375 = vector.broadcast %374 : vector<16x1xf32> to vector<16x16xf32>
    %376 = arith.mulf %370, %375 : vector<16x16xf32>
    %cst_131 = arith.constant dense<0.000000e+00> : vector<16x32xf32>
    %377 = tpu.matmul %376, %353, %cst_131 {dimension_numbers = #tpu.dot_dimension_numbers<[1], [0], [0], [1], [0, 0, 1, 1], [], []>} : vector<16x16xf32>, vector<16x32xf32>, vector<16x32xf32> -> vector<16x32xf32>
    %378 = arith.addf %352, %377 : vector<16x32xf32>
    %cst_132 = arith.constant 2.500000e-01 : f32
    %379 = vector.broadcast %cst_132 : f32 to vector<16x32xf32>
    %380 = arith.mulf %378, %379 : vector<16x32xf32>
    %c3 = arith.constant 3 : index
    %c0_133 = arith.constant 0 : index
    %381 = vector.load %arg6[%c3, %c0_133] : memref<8x32xf32, #tpu.memory_space<vmem>>, vector<1x32xf32>
    %382 = vector.broadcast %381 : vector<1x32xf32> to vector<16x32xf32>
    %383 = arith.addf %380, %382 : vector<16x32xf32>
    %cst_134 = arith.constant 0.000000e+00 : f32
    %384 = vector.broadcast %cst_134 : f32 to vector<16x32xf32>
    %385 = arith.cmpf ogt, %383, %384 : vector<16x32xf32>
    %cst_135 = arith.constant 0.000000e+00 : f32
    %386 = vector.broadcast %cst_135 : f32 to vector<16x32xf32>
    %387 = arith.minimumf %383, %386 : vector<16x32xf32>
    %388 = math.exp %387 : vector<16x32xf32>
    %cst_136 = arith.constant 1.000000e+00 : f32
    %389 = vector.broadcast %cst_136 : f32 to vector<16x32xf32>
    %390 = arith.subf %388, %389 : vector<16x32xf32>
    %391 = arith.select %385, %383, %390 : vector<16x32xi1>, vector<16x32xf32>
    %392 = arith.addf %391, %264 : vector<16x32xf32>
    %c0_137 = arith.constant 0 : index
    %c0_138 = arith.constant 0 : index
    %393 = vector.load %arg2[%c0_137, %c0_138] : memref<2x16xf32, #tpu.memory_space<vmem>>, vector<2x16xf32>
    %cst_139 = arith.constant dense<0.000000e+00> : vector<2x32xf32>
    %394 = tpu.matmul %393, %392, %cst_139 {dimension_numbers = #tpu.dot_dimension_numbers<[1], [0], [0], [1], [0, 0, 1, 1], [], []>} : vector<2x16xf32>, vector<16x32xf32>, vector<2x32xf32> -> vector<2x32xf32>
    %c0_140 = arith.constant 0 : index
    %c0_141 = arith.constant 0 : index
    %395 = vector.load %arg7[%c0_140, %c0_141] : memref<32x33xf32, #tpu.memory_space<vmem>>, vector<32x32xf32>
    %c0_142 = arith.constant 0 : index
    %c32 = arith.constant 32 : index
    %396 = vector.load %arg7[%c0_142, %c32] : memref<32x33xf32, #tpu.memory_space<vmem>>, vector<32x1xf32>
    %c4 = arith.constant 4 : index
    %c0_143 = arith.constant 0 : index
    %397 = vector.load %arg6[%c4, %c0_143] : memref<8x32xf32, #tpu.memory_space<vmem>>, vector<1x32xf32>
    %c5 = arith.constant 5 : index
    %c0_144 = arith.constant 0 : index
    %398 = vector.load %arg6[%c5, %c0_144] : memref<8x32xf32, #tpu.memory_space<vmem>>, vector<1x1xf32>
    %cst_145 = arith.constant dense<0.000000e+00> : vector<2x32xf32>
    %399 = tpu.matmul %394, %395, %cst_145 {dimension_numbers = #tpu.dot_dimension_numbers<[1], [0], [0], [1], [0, 0, 1, 1], [], []>} : vector<2x32xf32>, vector<32x32xf32>, vector<2x32xf32> -> vector<2x32xf32>
    %400 = vector.broadcast %397 : vector<1x32xf32> to vector<2x32xf32>
    %401 = arith.addf %399, %400 : vector<2x32xf32>
    %cst_146 = arith.constant 0.000000e+00 : f32
    %402 = vector.broadcast %cst_146 : f32 to vector<2x32xf32>
    %403 = arith.maximumf %401, %402 : vector<2x32xf32>
    %cst_147 = arith.constant dense<0.000000e+00> : vector<1x2xf32>
    %404 = tpu.matmul %396, %403, %cst_147 {dimension_numbers = #tpu.dot_dimension_numbers<[0], [1], [1], [0], [0, 1, 1, 0], [], []>} : vector<32x1xf32>, vector<2x32xf32>, vector<1x2xf32> -> vector<1x2xf32>
    %405 = vector.broadcast %398 : vector<1x1xf32> to vector<1x2xf32>
    %406 = arith.addf %404, %405 : vector<1x2xf32>
    %c0_148 = arith.constant 0 : index
    %c0_149 = arith.constant 0 : index
    %407 = vector.load %arg8[%c0_148, %c0_149] : memref<1x2xf32, #tpu.memory_space<vmem>>, vector<1x2xf32>
    tpu.vector_store %arg8[%c0_148, %c0_149], %406 {strides = array<i32>} : memref<1x2xf32, #tpu.memory_space<vmem>>, vector<1x2xf32>,
    return
  }
}

</mosaic_0001>

<llo_original>
// kernel: tpu_custom_call.1
$region0: #{tpu_custom_call.1}
  #allocation0 [shape = 'u32[]', space=smem, size = 0x4, offset = 0x4, fixed_abs, tag = 'smem constant byte address 0x4 - core index']
  #allocation1 [shape = 'u32[72,128]{1,0:T(1,128)}', space=vmem, size = 0x9000, scoped, tag = 'internal scratch']
  %s0 = inlined_call_operand.vmem [shape: f32[16,8], index: 0, kind: input, shape index: {}]
  %s1 = inlined_call_operand.hbm [shape: bf16[16,16], index: 1, kind: input, shape index: {}]
  %s2 = inlined_call_operand.vmem [shape: f32[2,16], index: 2, kind: input, shape index: {}]
  %s3 = inlined_call_operand.hbm [shape: f32[8,32], index: 3, kind: input, shape index: {}]
  %s4 = inlined_call_operand.hbm [shape: f32[3,32,128], index: 4, kind: input, shape index: {}]
  %s5 = inlined_call_operand.vmem [shape: f32[3,8,128], index: 5, kind: input, shape index: {}]
  %s6 = inlined_call_operand.hbm [shape: f32[8,32], index: 6, kind: input, shape index: {}]
  %s7 = inlined_call_operand.hbm [shape: f32[32,33], index: 7, kind: input, shape index: {}]
  %s8 = inlined_call_operand.hbm [shape: f32[1,2], index: 8, kind: output, shape index: {}]
  %s9 = sld [smem:[#allocation0]]
  $region62: #{tpu_custom_call.1} parent=0
    _
  %s11 = ssub.s32 1, %s9
  %s12 = scalar_select 0, %s11, %s9
  $region1: #{tpu_custom_call.1} parent=0
    #allocation2 [shape = 'u8[4096]{0}', space=vmem, size = 0x1000, scoped, tag = 'input window, operand 1, single buffered']
    #allocation3 [shape = 's32[1]{0}', space=sflag, size = 0x4, scoped, tag = 'scoped memory for tpu_custom_call.1']
    #allocation4 [shape = 's32[1]{0}', space=sflag, size = 0x4, scoped, tag = 'scoped memory for tpu_custom_call.1']
    #allocation5 [shape = 'u8[4096]{0}', space=vmem, size = 0x1000, scoped, tag = 'input window, operand 3, single buffered']
    #allocation6 [shape = 's32[1]{0}', space=sflag, size = 0x4, scoped, tag = 'scoped memory for tpu_custom_call.1']
    #allocation7 [shape = 'u8[49152]{0}', space=vmem, size = 0xc000, scoped, tag = 'input window, operand 4, single buffered']
    #allocation8 [shape = 'u8[4096]{0}', space=vmem, size = 0x1000, scoped, tag = 'input window, operand 6, single buffered']
    #allocation9 [shape = 's32[1]{0}', space=sflag, size = 0x4, scoped, tag = 'scoped memory for tpu_custom_call.1']
    #allocation10 [shape = 'u8[16384]{0}', space=vmem, size = 0x4000, scoped, tag = 'input window, operand 7, single buffered']
    #allocation11 [shape = 'u8[512]{0}', space=vmem, size = 0x400, scoped, tag = 'output window, operand 0, single buffered']
    %13 = vsyncpa [#allocation3], 0
    %14 = vsyncpa [#allocation6], 0
    %15 = vsyncpa [#allocation9], 0
    %16 = vsyncpa [#allocation4], 0
    // Predicated region
    $region2: #{tpu_custom_call.1} parent=1 // pred_check
      _
    $region3: #{tpu_custom_call.1} parent=1 // pred_check_branch
      %18 = sbr.rel (0) target = $region5
    $region4: #{tpu_custom_call.1} parent=1 // pred_region
      _
    $region5: #{tpu_custom_call.1} parent=1 // pred_fallthru
      _
    // Predicated region
    $region6: #{tpu_custom_call.1} parent=1 // pred_check
      _
    $region7: #{tpu_custom_call.1} parent=1 // pred_check_branch
      %20 = sbr.rel (0) target = $region9
    $region8: #{tpu_custom_call.1} parent=1 // pred_region
      %22 = vsyncadd [#allocation3], 0
      %s23 = sshll.u32 %s1, 4
      %s24 = int_to_ptr.hbm [resolvable:$true] %s23
      %s25 = sshll.u32 [#allocation2], 4
      %s26 = int_to_ptr.vmem [resolvable:$true] %s25
      %31 = dma.hbm_to_vmem [thread:$0]  %s24, 128, %s26, [#allocation3], 64, 64, 4
    $region9: #{tpu_custom_call.1} parent=1 // pred_fallthru
      _
    // Predicated region
    $region10: #{tpu_custom_call.1} parent=1 // pred_check
      _
    $region11: #{tpu_custom_call.1} parent=1 // pred_check_branch
      %33 = sbr.rel (0) target = $region13
    $region12: #{tpu_custom_call.1} parent=1 // pred_region
      _
    $region13: #{tpu_custom_call.1} parent=1 // pred_fallthru
      _
    // Predicated region
    $region14: #{tpu_custom_call.1} parent=1 // pred_check
      _
    $region15: #{tpu_custom_call.1} parent=1 // pred_check_branch
      %35 = sbr.rel (0) target = $region17
    $region16: #{tpu_custom_call.1} parent=1 // pred_region
      %37 = vsyncadd [#allocation6], 0
      %s39 = sshll.u32 %s3, 4
      %s40 = int_to_ptr.hbm [resolvable:$true] %s39
      %s41 = sshll.u32 [#allocation5], 4
      %s42 = int_to_ptr.vmem [resolvable:$true] %s41
      %44 = dma.hbm_to_vmem [thread:$0]  %s40, 128, %s42, [#allocation6]
    $region17: #{tpu_custom_call.1} parent=1 // pred_fallthru
      _
    // Predicated region
    $region18: #{tpu_custom_call.1} parent=1 // pred_check
      _
    $region19: #{tpu_custom_call.1} parent=1 // pred_check_branch
      %46 = sbr.rel (0) target = $region21
    $region20: #{tpu_custom_call.1} parent=1 // pred_region
      %48 = vsyncadd [#allocation6], 0
      %s49 = sshll.u32 %s4, 4
      %s50 = int_to_ptr.hbm [resolvable:$true] %s49
      %s51 = sshll.u32 [#allocation7], 4
      %s52 = int_to_ptr.vmem [resolvable:$true] %s51
      %57 = dma.hbm_to_vmem [thread:$0]  %s50, 1536, %s52, [#allocation6], 128, 128, 8
    $region21: #{tpu_custom_call.1} parent=1 // pred_fallthru
      _
    // Predicated region
    $region22: #{tpu_custom_call.1} parent=1 // pred_check
      _
    $region23: #{tpu_custom_call.1} parent=1 // pred_check_branch
      %59 = sbr.rel (0) target = $region25
    $region24: #{tpu_custom_call.1} parent=1 // pred_region
      _
    $region25: #{tpu_custom_call.1} parent=1 // pred_fallthru
      _
    // Predicated region
    $region26: #{tpu_custom_call.1} parent=1 // pred_check
      _
    $region27: #{tpu_custom_call.1} parent=1 // pred_check_branch
      %61 = sbr.rel (0) target = $region29
    $region28: #{tpu_custom_call.1} parent=1 // pred_region
      %63 = vsyncadd [#allocation9], 0
      %s65 = sshll.u32 %s6, 4
      %s66 = int_to_ptr.hbm [resolvable:$true] %s65
      %s67 = sshll.u32 [#allocation8], 4
      %s68 = int_to_ptr.vmem [resolvable:$true] %s67
      %70 = dma.hbm_to_vmem [thread:$0]  %s66, 128, %s68, [#allocation9]
    $region29: #{tpu_custom_call.1} parent=1 // pred_fallthru
      _
    // Predicated region
    $region30: #{tpu_custom_call.1} parent=1 // pred_check
      _
    $region31: #{tpu_custom_call.1} parent=1 // pred_check_branch
      %72 = sbr.rel (0) target = $region33
    $region32: #{tpu_custom_call.1} parent=1 // pred_region
      %74 = vsyncadd [#allocation9], 0
      %s75 = sshll.u32 %s7, 4
      %s76 = int_to_ptr.hbm [resolvable:$true] %s75
      %s77 = sshll.u32 [#allocation10], 4
      %s78 = int_to_ptr.vmem [resolvable:$true] %s77
      %83 = dma.hbm_to_vmem [thread:$0]  %s76, 512, %s78, [#allocation9], 128, 128, 8
    $region33: #{tpu_custom_call.1} parent=1 // pred_fallthru
      _
    // Predicated region
    $region34: #{tpu_custom_call.1} parent=1 // pred_check
      _
    $region35: #{tpu_custom_call.1} parent=1 // pred_check_branch
      %85 = sbr.rel (0) target = $region37
    $region36: #{tpu_custom_call.1} parent=1 // pred_region
      %87 = dma.done [#allocation3], 128
    $region37: #{tpu_custom_call.1} parent=1 // pred_fallthru
      _
    // Predicated region
    $region38: #{tpu_custom_call.1} parent=1 // pred_check
      _
    $region39: #{tpu_custom_call.1} parent=1 // pred_check_branch
      %89 = sbr.rel (0) target = $region41
    $region40: #{tpu_custom_call.1} parent=1 // pred_region
      %91 = dma.done [#allocation6], 128
    $region41: #{tpu_custom_call.1} parent=1 // pred_fallthru
      _
    // Predicated region
    $region42: #{tpu_custom_call.1} parent=1 // pred_check
      _
    $region43: #{tpu_custom_call.1} parent=1 // pred_check_branch
      %93 = sbr.rel (0) target = $region45
    $region44: #{tpu_custom_call.1} parent=1 // pred_region
      %95 = dma.done [#allocation6], 1536
    $region45: #{tpu_custom_call.1} parent=1 // pred_fallthru
      _
    // Predicated region
    $region46: #{tpu_custom_call.1} parent=1 // pred_check
      _
    $region47: #{tpu_custom_call.1} parent=1 // pred_check_branch
      %97 = sbr.rel (0) target = $region49
    $region48: #{tpu_custom_call.1} parent=1 // pred_region
      %99 = dma.done [#allocation9], 128
    $region49: #{tpu_custom_call.1} parent=1 // pred_fallthru
      _
    // Predicated region
    $region50: #{tpu_custom_call.1} parent=1 // pred_check
      _
    $region51: #{tpu_custom_call.1} parent=1 // pred_check_branch
      %101 = sbr.rel (0) target = $region53
    $region52: #{tpu_custom_call.1} parent=1 // pred_region
      %103 = dma.done [#allocation9], 512
    $region53: #{tpu_custom_call.1} parent=1 // pred_fallthru
      _
    %v104 = vld [vmem:[#allocation2] sm:$0xf]
    %v105 = vld [vmem:[#allocation2 + $0x4] sm:$0xf]
    %v106 = vunpack.c.l.bf16 %v104
    %v107 = vunpack.c.l.bf16 %v105
    %vm108 = vcmp.gt.f32.partialorder %v106, 0.0
    %vm109 = vcmp.gt.f32.partialorder %v107, 0.0
    %v110 = vld [vmem:[#allocation8] sm:$0x1]
    %v111 = vld [vmem:[%s0] sm:$0xff]
    %v112 = vld [vmem:[%s0 + $0x8] sm:$0xff]
    %v113 = vld [vmem:[#allocation5] sm:$0xff]
    %v114 = vperm.slane %v110, 0
    %vm115 = vcmask 64512
    %v117 = vsel %vm115, %v111, 0
    %v120 = vsel %vm115, %v112, 0
    %122 = vmatpush.msra.mxu0 0.0
    %123 = vmatpush.msra.mxu0 0.0
    %124 = vmatpush.msra.mxu0 0.0
    %125 = vmatpush.msra.mxu0 0.0
    %126 = vmatpush.msra.mxu0 0.0
    %127 = vmatpush.msra.mxu0 0.0
    %128 = vmatpush.msra.mxu0 0.0
    %129 = vmatpush.msra.mxu0 0.0
    %130 = vmatpush.msra.mxu0 0.0
    %131 = vmatpush.msra.mxu0 0.0
    %132 = vmatpush.msra.mxu0 0.0
    %133 = vmatpush.msra.mxu0 0.0
    %134 = vmatpush.msra.mxu0 0.0
    %135 = vmatpush.msra.mxu0 0.0
    %136 = vmatpush.msra.mxu0 0.0
    %137 = vmatpush.msra.mxu0 %v113
    %138 = vmatmul.f32.gmra.mxu0 %v117
    %v139 = vpop.f32.mrf.mxu0
    %v140 = vadd.f32 %v114, %v139
    %141 = vmatmul.f32.gmra.mxu0 %v120
    %v142 = vpop.f32.mrf.mxu0
    %v143 = vadd.f32 %v114, %v142
    %144 = vdwg.mxu0
    %v145 = vld [vmem:[#allocation7] sm:$0xff]
    %v146 = vld [vmem:[#allocation7 + $0x8] sm:$0xff]
    %v147 = vld [vmem:[#allocation7 + $0x10] sm:$0xff]
    %v148 = vld [vmem:[#allocation7 + $0x18] sm:$0xff]
    %vm149 = vcmask 261120
    %v151 = vsel %vm149, %v140, 0
    %v154 = vsel %vm149, %v143, 0
    %156 = vmatpush.msra.mxu0 0.0
    %157 = vmatpush.msra.mxu0 0.0
    %158 = vmatpush.msra.mxu0 0.0
    %159 = vmatpush.msra.mxu0 0.0
    %160 = vmatpush.msra.mxu0 0.0
    %161 = vmatpush.msra.mxu0 0.0
    %162 = vmatpush.msra.mxu0 0.0
    %163 = vmatpush.msra.mxu0 0.0
    %164 = vmatpush.msra.mxu0 0.0
    %165 = vmatpush.msra.mxu0 0.0
    %166 = vmatpush.msra.mxu0 0.0
    %167 = vmatpush.msra.mxu0 0.0
    %168 = vmatpush.msra.mxu0 %v148
    %169 = vmatpush.msra.mxu0 %v147
    %170 = vmatpush.msra.mxu0 %v146
    %171 = vmatpush.msra.mxu0 %v145
    %172 = vmatmul.f32.gmra.mxu0 %v151
    %v173 = vpop.f32.mrf.mxu0
    %v174 = vadd.f32 0.0, %v173
    %175 = vmatmul.f32.gmra.mxu0 %v154
    %v176 = vpop.f32.mrf.mxu0
    %v177 = vadd.f32 0.0, %v176
    %178 = vdwg.mxu0
    %v179 = vld [vmem:[%s5] sm:$0xff]
    %180 = vmatpush.xpose.msra.mxu0 0.0
    %181 = vmatpush.xpose.msra.mxu0 0.0
    %182 = vmatpush.xpose.msra.mxu0 0.0
    %183 = vmatpush.xpose.msra.mxu0 0.0
    %184 = vmatpush.xpose.msra.mxu0 0.0
    %185 = vmatpush.xpose.msra.mxu0 0.0
    %186 = vmatpush.xpose.msra.mxu0 0.0
    %187 = vmatpush.xpose.msra.mxu0 0.0
    %188 = vmatpush.xpose.msra.mxu0 0.0
    %189 = vmatpush.xpose.msra.mxu0 0.0
    %190 = vmatpush.xpose.msra.mxu0 0.0
    %191 = vmatpush.xpose.msra.mxu0 0.0
    %192 = vmatpush.xpose.msra.mxu0 0.0
    %193 = vmatpush.xpose.msra.mxu0 0.0
    %194 = vmatpush.xpose.msra.mxu0 0.0
    %195 = vmatpush.xpose.msra.mxu0 %v179
    %196 = vmatmul.f32.gmra.mxu0 %v174
    %v197 = vpop.f32.mrf.mxu0
    %v198 = vadd.f32 0.0, %v197
    %199 = vmatmul.f32.gmra.mxu0 %v177
    %v200 = vpop.f32.mrf.mxu0
    %v201 = vadd.f32 0.0, %v200
    %202 = vdwg.mxu0
    %v204 = vrot.slane %v179, 4
    %206 = vmatpush.xpose.msra.mxu0 0.0
    %207 = vmatpush.xpose.msra.mxu0 0.0
    %208 = vmatpush.xpose.msra.mxu0 0.0
    %209 = vmatpush.xpose.msra.mxu0 0.0
    %210 = vmatpush.xpose.msra.mxu0 0.0
    %211 = vmatpush.xpose.msra.mxu0 0.0
    %212 = vmatpush.xpose.msra.mxu0 0.0
    %213 = vmatpush.xpose.msra.mxu0 0.0
    %214 = vmatpush.xpose.msra.mxu0 0.0
    %215 = vmatpush.xpose.msra.mxu0 0.0
    %216 = vmatpush.xpose.msra.mxu0 0.0
    %217 = vmatpush.xpose.msra.mxu0 0.0
    %218 = vmatpush.xpose.msra.mxu0 0.0
    %219 = vmatpush.xpose.msra.mxu0 0.0
    %220 = vmatpush.xpose.msra.mxu0 %v177
    %221 = vmatpush.xpose.msra.mxu0 %v174
    %222 = vmatmul.f32.gmra.mxu0 %v204
    %v223 = vpop.f32.mrf.mxu0
    %v224 = vadd.f32 0.0, %v223
    %225 = vdwg.mxu0
    %227 = vset.pattern.permute.xlu0 0
    %228 = vperm.xlu0 %227, %v198
    %v229 = vpop.permute.xlu0 %228
    %232 = vset.pattern.permute.xlu0 0
    %233 = vperm.xlu0 %232, %v201
    %v234 = vpop.permute.xlu0 %233
    %v236 = vperm.slane %v224, 0
    %v237 = vadd.f32 %v229, %v236
    %v238 = vadd.f32 %v234, %v236
    %vm239 = vcmp.gt.f32.partialorder %v237, 0.0
    %vm240 = vcmp.gt.f32.partialorder %v238, 0.0
    %v241 = vmul.f32 %v237, 0.2
    %v242 = vmul.f32 %v238, 0.2
    %v243 = vsel %vm239, %v237, %v241
    %v244 = vsel %vm240, %v238, %v242
    %v245 = vsel %vm108, %v243, -1e+30
    %v246 = vsel %vm109, %v244, -1e+30
    %vm247 = vcmask 130048
    %v248 = vsel %vm247, %v245, -inf
    %249 = vmax.xlane.f32.xlu0 %v248
    %v250 = vpop.xlane.xlu0 %249
    %v251 = vsel %vm247, %v246, -inf
    %252 = vmax.xlane.f32.xlu0 %v251
    %v253 = vpop.xlane.xlu0 %252
    %v254 = vsub.f32 %v245, %v250
    %v255 = vsub.f32 %v246, %v253
    %v256 = vmul.f32 %v254, 1.442695
    %v257 = vpow.pop %v256
    %v258 = vmul.f32 %v255, 1.442695
    %v259 = vpow.pop %v258
    %v260 = vsel %vm247, %v257, 0.0
    %261 = vadd.xlane.f32.xlu0 %v260
    %v262 = vpop.xlane.xlu0 %261
    %v263 = vsel %vm247, %v259, 0.0
    %264 = vadd.xlane.f32.xlu0 %v263
    %v265 = vpop.xlane.xlu0 %264
    %v266 = vrcp.pop %v262
    %v267 = vmul.f32 %v262, %v266
    %v268 = vsub.f32 1.0, %v267
    %v269 = vmul.f32 %v266, %v268
    %v270 = vadd.f32 %v266, %v269
    %vm271 = vweird.f32 %v262
    %vm272 = vweird.f32 %v266
    %vm273 = vmor %vm271, %vm272
    %v274 = vsel %vm273, %v266, %v270
    %v275 = vand.u32 2147483647, %v262
    %vm276 = vcmp.eq.f32.partialorder %v275, 8.507059e+37
    %v277 = vand.u32 %v262, 2147483648
    %v278 = vor.u32 1.1754944e-38, %v277
    %v279 = vsel %vm276, %v278, %v274
    %v280 = vmul.f32 1.0, %v279
    %v281 = vrcp.pop %v265
    %v282 = vmul.f32 %v265, %v281
    %v283 = vsub.f32 1.0, %v282
    %v284 = vmul.f32 %v281, %v283
    %v285 = vadd.f32 %v281, %v284
    %vm286 = vweird.f32 %v265
    %vm287 = vweird.f32 %v281
    %vm288 = vmor %vm286, %vm287
    %v289 = vsel %vm288, %v281, %v285
    %v290 = vand.u32 2147483647, %v265
    %vm291 = vcmp.eq.f32.partialorder %v290, 8.507059e+37
    %v292 = vand.u32 %v265, 2147483648
    %v293 = vor.u32 1.1754944e-38, %v292
    %v294 = vsel %vm291, %v293, %v289
    %v295 = vmul.f32 1.0, %v294
    %v296 = vmul.f32 %v257, %v280
    %v297 = vmul.f32 %v259, %v295
    %298 = vset.pattern.permute.xlu0 1
    %299 = vperm.xlu0 %298, %v198
    %v300 = vpop.permute.xlu0 %299
    %302 = vset.pattern.permute.xlu0 1
    %303 = vperm.xlu0 %302, %v201
    %v304 = vpop.permute.xlu0 %303
    %v306 = vperm.slane %v224, 1
    %v307 = vadd.f32 %v300, %v306
    %v308 = vadd.f32 %v304, %v306
    %vm309 = vcmp.gt.f32.partialorder %v307, 0.0
    %vm310 = vcmp.gt.f32.partialorder %v308, 0.0
    %v311 = vmul.f32 %v307, 0.2
    %v312 = vmul.f32 %v308, 0.2
    %v313 = vsel %vm309, %v307, %v311
    %v314 = vsel %vm310, %v308, %v312
    %v315 = vsel %vm108, %v313, -1e+30
    %v316 = vsel %vm109, %v314, -1e+30
    %v317 = vsel %vm247, %v315, -inf
    %318 = vmax.xlane.f32.xlu0 %v317
    %v319 = vpop.xlane.xlu0 %318
    %v320 = vsel %vm247, %v316, -inf
    %321 = vmax.xlane.f32.xlu0 %v320
    %v322 = vpop.xlane.xlu0 %321
    %v323 = vsub.f32 %v315, %v319
    %v324 = vsub.f32 %v316, %v322
    %v325 = vmul.f32 %v323, 1.442695
    %v326 = vpow.pop %v325
    %v327 = vmul.f32 %v324, 1.442695
    %v328 = vpow.pop %v327
    %v329 = vsel %vm247, %v326, 0.0
    %330 = vadd.xlane.f32.xlu0 %v329
    %v331 = vpop.xlane.xlu0 %330
    %v332 = vsel %vm247, %v328, 0.0
    %333 = vadd.xlane.f32.xlu0 %v332
    %v334 = vpop.xlane.xlu0 %333
    %v335 = vrcp.pop %v331
    %v336 = vmul.f32 %v331, %v335
    %v337 = vsub.f32 1.0, %v336
    %v338 = vmul.f32 %v335, %v337
    %v339 = vadd.f32 %v335, %v338
    %vm340 = vweird.f32 %v331
    %vm341 = vweird.f32 %v335
    %vm342 = vmor %vm340, %vm341
    %v343 = vsel %vm342, %v335, %v339
    %v344 = vand.u32 2147483647, %v331
    %vm345 = vcmp.eq.f32.partialorder %v344, 8.507059e+37
    %v346 = vand.u32 %v331, 2147483648
    %v347 = vor.u32 1.1754944e-38, %v346
    %v348 = vsel %vm345, %v347, %v343
    %v349 = vmul.f32 1.0, %v348
    %v350 = vrcp.pop %v334
    %v351 = vmul.f32 %v334, %v350
    %v352 = vsub.f32 1.0, %v351
    %v353 = vmul.f32 %v350, %v352
    %v354 = vadd.f32 %v350, %v353
    %vm355 = vweird.f32 %v334
    %vm356 = vweird.f32 %v350
    %vm357 = vmor %vm355, %vm356
    %v358 = vsel %vm357, %v350, %v354
    %v359 = vand.u32 2147483647, %v334
    %vm360 = vcmp.eq.f32.partialorder %v359, 8.507059e+37
    %v361 = vand.u32 %v334, 2147483648
    %v362 = vor.u32 1.1754944e-38, %v361
    %v363 = vsel %vm360, %v362, %v358
    %v364 = vmul.f32 1.0, %v363
    %v365 = vmul.f32 %v326, %v349
    %v366 = vmul.f32 %v328, %v364
    %369 = vrot.lane.b32.xlu0 %v174, 96
    %v370 = vpop.permute.xlu0 %369
    %371 = vrot.lane.b32.xlu0 %v177, 96
    %v372 = vpop.permute.xlu0 %371
    %v376 = vsel %vm247, %v365, 0
    %v379 = vsel %vm247, %v366, 0
    %381 = vmatpush.msra.mxu0 0.0
    %382 = vmatpush.msra.mxu0 0.0
    %383 = vmatpush.msra.mxu0 0.0
    %384 = vmatpush.msra.mxu0 0.0
    %385 = vmatpush.msra.mxu0 0.0
    %386 = vmatpush.msra.mxu0 0.0
    %387 = vmatpush.msra.mxu0 0.0
    %388 = vmatpush.msra.mxu0 0.0
    %389 = vmatpush.msra.mxu0 0.0
    %390 = vmatpush.msra.mxu0 0.0
    %391 = vmatpush.msra.mxu0 0.0
    %392 = vmatpush.msra.mxu0 0.0
    %393 = vmatpush.msra.mxu0 0.0
    %394 = vmatpush.msra.mxu0 0.0
    %395 = vmatpush.msra.mxu0 %v372
    %396 = vmatpush.msra.mxu0 %v370
    %397 = vmatmul.f32.gmra.mxu0 %v376
    %v398 = vpop.f32.mrf.mxu0
    %v399 = vadd.f32 0.0, %v398
    %400 = vmatmul.f32.gmra.mxu0 %v379
    %v401 = vpop.f32.mrf.mxu0
    %v402 = vadd.f32 0.0, %v401
    %403 = vdwg.mxu0
    %v405 = vsel %vm247, %v296, 0
    %v408 = vsel %vm247, %v297, 0
    %410 = vmatpush.msra.mxu0 0.0
    %411 = vmatpush.msra.mxu0 0.0
    %412 = vmatpush.msra.mxu0 0.0
    %413 = vmatpush.msra.mxu0 0.0
    %414 = vmatpush.msra.mxu0 0.0
    %415 = vmatpush.msra.mxu0 0.0
    %416 = vmatpush.msra.mxu0 0.0
    %417 = vmatpush.msra.mxu0 0.0
    %418 = vmatpush.msra.mxu0 0.0
    %419 = vmatpush.msra.mxu0 0.0
    %420 = vmatpush.msra.mxu0 0.0
    %421 = vmatpush.msra.mxu0 0.0
    %422 = vmatpush.msra.mxu0 0.0
    %423 = vmatpush.msra.mxu0 0.0
    %424 = vmatpush.msra.mxu0 %v177
    %425 = vmatpush.msra.mxu0 %v174
    %426 = vmatmul.f32.gmra.mxu0 %v405
    %v427 = vpop.f32.mrf.mxu0
    %v428 = vadd.f32 %v399, %v427
    %429 = vmatmul.f32.gmra.mxu0 %v408
    %v430 = vpop.f32.mrf.mxu0
    %v431 = vadd.f32 %v402, %v430
    %432 = vdwg.mxu0
    %433 = vset.pattern.permute.xlu0 2
    %434 = vperm.xlu0 %433, %v198
    %v435 = vpop.permute.xlu0 %434
    %437 = vset.pattern.permute.xlu0 2
    %438 = vperm.xlu0 %437, %v201
    %v439 = vpop.permute.xlu0 %438
    %v441 = vperm.slane %v224, 2
    %v442 = vadd.f32 %v435, %v441
    %v443 = vadd.f32 %v439, %v441
    %vm444 = vcmp.gt.f32.partialorder %v442, 0.0
    %vm445 = vcmp.gt.f32.partialorder %v443, 0.0
    %v446 = vmul.f32 %v442, 0.2
    %v447 = vmul.f32 %v443, 0.2
    %v448 = vsel %vm444, %v442, %v446
    %v449 = vsel %vm445, %v443, %v447
    %v450 = vsel %vm108, %v448, -1e+30
    %v451 = vsel %vm109, %v449, -1e+30
    %v452 = vsel %vm247, %v450, -inf
    %453 = vmax.xlane.f32.xlu0 %v452
    %v454 = vpop.xlane.xlu0 %453
    %v455 = vsel %vm247, %v451, -inf
    %456 = vmax.xlane.f32.xlu0 %v455
    %v457 = vpop.xlane.xlu0 %456
    %v458 = vsub.f32 %v450, %v454
    %v459 = vsub.f32 %v451, %v457
    %v460 = vmul.f32 %v458, 1.442695
    %v461 = vpow.pop %v460
    %v462 = vmul.f32 %v459, 1.442695
    %v463 = vpow.pop %v462
    %v464 = vsel %vm247, %v461, 0.0
    %465 = vadd.xlane.f32.xlu0 %v464
    %v466 = vpop.xlane.xlu0 %465
    %v467 = vsel %vm247, %v463, 0.0
    %468 = vadd.xlane.f32.xlu0 %v467
    %v469 = vpop.xlane.xlu0 %468
    %v470 = vrcp.pop %v466
    %v471 = vmul.f32 %v466, %v470
    %v472 = vsub.f32 1.0, %v471
    %v473 = vmul.f32 %v470, %v472
    %v474 = vadd.f32 %v470, %v473
    %vm475 = vweird.f32 %v466
    %vm476 = vweird.f32 %v470
    %vm477 = vmor %vm475, %vm476
    %v478 = vsel %vm477, %v470, %v474
    %v479 = vand.u32 2147483647, %v466
    %vm480 = vcmp.eq.f32.partialorder %v479, 8.507059e+37
    %v481 = vand.u32 %v466, 2147483648
    %v482 = vor.u32 1.1754944e-38, %v481
    %v483 = vsel %vm480, %v482, %v478
    %v484 = vmul.f32 1.0, %v483
    %v485 = vrcp.pop %v469
    %v486 = vmul.f32 %v469, %v485
    %v487 = vsub.f32 1.0, %v486
    %v488 = vmul.f32 %v485, %v487
    %v489 = vadd.f32 %v485, %v488
    %vm490 = vweird.f32 %v469
    %vm491 = vweird.f32 %v485
    %vm492 = vmor %vm490, %vm491
    %v493 = vsel %vm492, %v485, %v489
    %v494 = vand.u32 2147483647, %v469
    %vm495 = vcmp.eq.f32.partialorder %v494, 8.507059e+37
    %v496 = vand.u32 %v469, 2147483648
    %v497 = vor.u32 1.1754944e-38, %v496
    %v498 = vsel %vm495, %v497, %v493
    %v499 = vmul.f32 1.0, %v498
    %v500 = vmul.f32 %v461, %v484
    %v501 = vmul.f32 %v463, %v499
    %502 = vrot.lane.b32.xlu0 %v174, 64
    %v503 = vpop.permute.xlu0 %502
    %504 = vrot.lane.b32.xlu0 %v177, 64
    %v505 = vpop.permute.xlu0 %504
    %v509 = vsel %vm247, %v500, 0
    %v512 = vsel %vm247, %v501, 0
    %514 = vmatpush.msra.mxu0 0.0
    %515 = vmatpush.msra.mxu0 0.0
    %516 = vmatpush.msra.mxu0 0.0
    %517 = vmatpush.msra.mxu0 0.0
    %518 = vmatpush.msra.mxu0 0.0
    %519 = vmatpush.msra.mxu0 0.0
    %520 = vmatpush.msra.mxu0 0.0
    %521 = vmatpush.msra.mxu0 0.0
    %522 = vmatpush.msra.mxu0 0.0
    %523 = vmatpush.msra.mxu0 0.0
    %524 = vmatpush.msra.mxu0 0.0
    %525 = vmatpush.msra.mxu0 0.0
    %526 = vmatpush.msra.mxu0 0.0
    %527 = vmatpush.msra.mxu0 0.0
    %528 = vmatpush.msra.mxu0 %v505
    %529 = vmatpush.msra.mxu0 %v503
    %530 = vmatmul.f32.gmra.mxu0 %v509
    %v531 = vpop.f32.mrf.mxu0
    %v532 = vadd.f32 0.0, %v531
    %533 = vmatmul.f32.gmra.mxu0 %v512
    %v534 = vpop.f32.mrf.mxu0
    %v535 = vadd.f32 0.0, %v534
    %536 = vdwg.mxu0
    %v537 = vadd.f32 %v428, %v532
    %v538 = vadd.f32 %v431, %v535
    %539 = vset.pattern.permute.xlu0 3
    %540 = vperm.xlu0 %539, %v198
    %v541 = vpop.permute.xlu0 %540
    %543 = vset.pattern.permute.xlu0 3
    %544 = vperm.xlu0 %543, %v201
    %v545 = vpop.permute.xlu0 %544
    %v547 = vperm.slane %v224, 3
    %v548 = vadd.f32 %v541, %v547
    %v549 = vadd.f32 %v545, %v547
    %vm550 = vcmp.gt.f32.partialorder %v548, 0.0
    %vm551 = vcmp.gt.f32.partialorder %v549, 0.0
    %v552 = vmul.f32 %v548, 0.2
    %v553 = vmul.f32 %v549, 0.2
    %v554 = vsel %vm550, %v548, %v552
    %v555 = vsel %vm551, %v549, %v553
    %v556 = vsel %vm108, %v554, -1e+30
    %v557 = vsel %vm109, %v555, -1e+30
    %v558 = vsel %vm247, %v556, -inf
    %559 = vmax.xlane.f32.xlu0 %v558
    %v560 = vpop.xlane.xlu0 %559
    %v561 = vsel %vm247, %v557, -inf
    %562 = vmax.xlane.f32.xlu0 %v561
    %v563 = vpop.xlane.xlu0 %562
    %v564 = vsub.f32 %v556, %v560
    %v565 = vsub.f32 %v557, %v563
    %v566 = vmul.f32 %v564, 1.442695
    %v567 = vpow.pop %v566
    %v568 = vmul.f32 %v565, 1.442695
    %v569 = vpow.pop %v568
    %v570 = vsel %vm247, %v567, 0.0
    %571 = vadd.xlane.f32.xlu0 %v570
    %v572 = vpop.xlane.xlu0 %571
    %v573 = vsel %vm247, %v569, 0.0
    %574 = vadd.xlane.f32.xlu0 %v573
    %v575 = vpop.xlane.xlu0 %574
    %v576 = vrcp.pop %v572
    %v577 = vmul.f32 %v572, %v576
    %v578 = vsub.f32 1.0, %v577
    %v579 = vmul.f32 %v576, %v578
    %v580 = vadd.f32 %v576, %v579
    %vm581 = vweird.f32 %v572
    %vm582 = vweird.f32 %v576
    %vm583 = vmor %vm581, %vm582
    %v584 = vsel %vm583, %v576, %v580
    %v585 = vand.u32 2147483647, %v572
    %vm586 = vcmp.eq.f32.partialorder %v585, 8.507059e+37
    %v587 = vand.u32 %v572, 2147483648
    %v588 = vor.u32 1.1754944e-38, %v587
    %v589 = vsel %vm586, %v588, %v584
    %v590 = vmul.f32 1.0, %v589
    %v591 = vrcp.pop %v575
    %v592 = vmul.f32 %v575, %v591
    %v593 = vsub.f32 1.0, %v592
    %v594 = vmul.f32 %v591, %v593
    %v595 = vadd.f32 %v591, %v594
    %vm596 = vweird.f32 %v575
    %vm597 = vweird.f32 %v591
    %vm598 = vmor %vm596, %vm597
    %v599 = vsel %vm598, %v591, %v595
    %v600 = vand.u32 2147483647, %v575
    %vm601 = vcmp.eq.f32.partialorder %v600, 8.507059e+37
    %v602 = vand.u32 %v575, 2147483648
    %v603 = vor.u32 1.1754944e-38, %v602
    %v604 = vsel %vm601, %v603, %v599
    %v605 = vmul.f32 1.0, %v604
    %v606 = vmul.f32 %v567, %v590
    %v607 = vmul.f32 %v569, %v605
    %608 = vrot.lane.b32.xlu0 %v174, 32
    %v609 = vpop.permute.xlu0 %608
    %610 = vrot.lane.b32.xlu0 %v177, 32
    %v611 = vpop.permute.xlu0 %610
    %v615 = vsel %vm247, %v606, 0
    %v618 = vsel %vm247, %v607, 0
    %620 = vmatpush.msra.mxu0 0.0
    %621 = vmatpush.msra.mxu0 0.0
    %622 = vmatpush.msra.mxu0 0.0
    %623 = vmatpush.msra.mxu0 0.0
    %624 = vmatpush.msra.mxu0 0.0
    %625 = vmatpush.msra.mxu0 0.0
    %626 = vmatpush.msra.mxu0 0.0
    %627 = vmatpush.msra.mxu0 0.0
    %628 = vmatpush.msra.mxu0 0.0
    %629 = vmatpush.msra.mxu0 0.0
    %630 = vmatpush.msra.mxu0 0.0
    %631 = vmatpush.msra.mxu0 0.0
    %632 = vmatpush.msra.mxu0 0.0
    %633 = vmatpush.msra.mxu0 0.0
    %634 = vmatpush.msra.mxu0 %v611
    %635 = vmatpush.msra.mxu0 %v609
    %636 = vmatmul.f32.gmra.mxu0 %v615
    %v637 = vpop.f32.mrf.mxu0
    %v638 = vadd.f32 0.0, %v637
    %639 = vmatmul.f32.gmra.mxu0 %v618
    %v640 = vpop.f32.mrf.mxu0
    %v641 = vadd.f32 0.0, %v640
    %642 = vdwg.mxu0
    %v643 = vadd.f32 %v537, %v638
    %v644 = vadd.f32 %v538, %v641
    %v645 = vmul.f32 %v643, 0.25
    %v646 = vmul.f32 %v644, 0.25
    %v647 = vld [vmem:[#allocation8 + $0x1] sm:$0x1]
    %v648 = vperm.slane %v647, 0
    %v649 = vadd.f32 %v645, %v648
    %v650 = vadd.f32 %v646, %v648
    %vm651 = vcmp.gt.f32.partialorder %v649, 0.0
    %vm652 = vcmp.gt.f32.partialorder %v650, 0.0
    %v653 = vmin.f32 %v649, 0.0
    %v654 = vmin.f32 %v650, 0.0
    %v655 = vmul.f32 %v653, 1.442695
    %v656 = vpow.pop %v655
    %v657 = vmul.f32 %v654, 1.442695
    %v658 = vpow.pop %v657
    %v659 = vsub.f32 %v656, 1.0
    %v660 = vsub.f32 %v658, 1.0
    %v661 = vsel %vm651, %v649, %v659
    %v662 = vsel %vm652, %v650, %v660
    %v663 = vadd.f32 %v661, %v140
    %v664 = vadd.f32 %v662, %v143
    %s665 = scalar_lea.vmem [#allocation7], 32
    %v666 = vld [vmem:[%s665] sm:$0xff]
    %v667 = vld [vmem:[%s665 + $0x8] sm:$0xff]
    %v668 = vld [vmem:[%s665 + $0x10] sm:$0xff]
    %v669 = vld [vmem:[%s665 + $0x18] sm:$0xff]
    %v671 = vsel %vm149, %v663, 0
    %v674 = vsel %vm149, %v664, 0
    %676 = vmatpush.msra.mxu0 0.0
    %677 = vmatpush.msra.mxu0 0.0
    %678 = vmatpush.msra.mxu0 0.0
    %679 = vmatpush.msra.mxu0 0.0
    %680 = vmatpush.msra.mxu0 0.0
    %681 = vmatpush.msra.mxu0 0.0
    %682 = vmatpush.msra.mxu0 0.0
    %683 = vmatpush.msra.mxu0 0.0
    %684 = vmatpush.msra.mxu0 0.0
    %685 = vmatpush.msra.mxu0 0.0
    %686 = vmatpush.msra.mxu0 0.0
    %687 = vmatpush.msra.mxu0 0.0
    %688 = vmatpush.msra.mxu0 %v669
    %689 = vmatpush.msra.mxu0 %v668
    %690 = vmatpush.msra.mxu0 %v667
    %691 = vmatpush.msra.mxu0 %v666
    %692 = vmatmul.f32.gmra.mxu0 %v671
    %v693 = vpop.f32.mrf.mxu0
    %v694 = vadd.f32 0.0, %v693
    %695 = vmatmul.f32.gmra.mxu0 %v674
    %v696 = vpop.f32.mrf.mxu0
    %v697 = vadd.f32 0.0, %v696
    %698 = vdwg.mxu0
    %s699 = scalar_lea.vmem %s5, 8
    %v700 = vld [vmem:[%s699] sm:$0xff]
    %701 = vmatpush.xpose.msra.mxu0 0.0
    %702 = vmatpush.xpose.msra.mxu0 0.0
    %703 = vmatpush.xpose.msra.mxu0 0.0
    %704 = vmatpush.xpose.msra.mxu0 0.0
    %705 = vmatpush.xpose.msra.mxu0 0.0
    %706 = vmatpush.xpose.msra.mxu0 0.0
    %707 = vmatpush.xpose.msra.mxu0 0.0
    %708 = vmatpush.xpose.msra.mxu0 0.0
    %709 = vmatpush.xpose.msra.mxu0 0.0
    %710 = vmatpush.xpose.msra.mxu0 0.0
    %711 = vmatpush.xpose.msra.mxu0 0.0
    %712 = vmatpush.xpose.msra.mxu0 0.0
    %713 = vmatpush.xpose.msra.mxu0 0.0
    %714 = vmatpush.xpose.msra.mxu0 0.0
    %715 = vmatpush.xpose.msra.mxu0 0.0
    %716 = vmatpush.xpose.msra.mxu0 %v700
    %717 = vmatmul.f32.gmra.mxu0 %v694
    %v718 = vpop.f32.mrf.mxu0
    %v719 = vadd.f32 0.0, %v718
    %720 = vmatmul.f32.gmra.mxu0 %v697
    %v721 = vpop.f32.mrf.mxu0
    %v722 = vadd.f32 0.0, %v721
    %723 = vdwg.mxu0
    %v725 = vrot.slane %v700, 4
    %727 = vmatpush.xpose.msra.mxu0 0.0
    %728 = vmatpush.xpose.msra.mxu0 0.0
    %729 = vmatpush.xpose.msra.mxu0 0.0
    %730 = vmatpush.xpose.msra.mxu0 0.0
    %731 = vmatpush.xpose.msra.mxu0 0.0
    %732 = vmatpush.xpose.msra.mxu0 0.0
    %733 = vmatpush.xpose.msra.mxu0 0.0
    %734 = vmatpush.xpose.msra.mxu0 0.0
    %735 = vmatpush.xpose.msra.mxu0 0.0
    %736 = vmatpush.xpose.msra.mxu0 0.0
    %737 = vmatpush.xpose.msra.mxu0 0.0
    %738 = vmatpush.xpose.msra.mxu0 0.0
    %739 = vmatpush.xpose.msra.mxu0 0.0
    %740 = vmatpush.xpose.msra.mxu0 0.0
    %741 = vmatpush.xpose.msra.mxu0 %v697
    %742 = vmatpush.xpose.msra.mxu0 %v694
    %743 = vmatmul.f32.gmra.mxu0 %v725
    %v744 = vpop.f32.mrf.mxu0
    %v745 = vadd.f32 0.0, %v744
    %746 = vdwg.mxu0
    %748 = vset.pattern.permute.xlu0 0
    %749 = vperm.xlu0 %748, %v719
    %v750 = vpop.permute.xlu0 %749
    %753 = vset.pattern.permute.xlu0 0
    %754 = vperm.xlu0 %753, %v722
    %v755 = vpop.permute.xlu0 %754
    %v757 = vperm.slane %v745, 0
    %v758 = vadd.f32 %v750, %v757
    %v759 = vadd.f32 %v755, %v757
    %vm760 = vcmp.gt.f32.partialorder %v758, 0.0
    %vm761 = vcmp.gt.f32.partialorder %v759, 0.0
    %v762 = vmul.f32 %v758, 0.2
    %v763 = vmul.f32 %v759, 0.2
    %v764 = vsel %vm760, %v758, %v762
    %v765 = vsel %vm761, %v759, %v763
    %v766 = vsel %vm108, %v764, -1e+30
    %v767 = vsel %vm109, %v765, -1e+30
    %v768 = vsel %vm247, %v766, -inf
    %769 = vmax.xlane.f32.xlu0 %v768
    %v770 = vpop.xlane.xlu0 %769
    %v771 = vsel %vm247, %v767, -inf
    %772 = vmax.xlane.f32.xlu0 %v771
    %v773 = vpop.xlane.xlu0 %772
    %v774 = vsub.f32 %v766, %v770
    %v775 = vsub.f32 %v767, %v773
    %v776 = vmul.f32 %v774, 1.442695
    %v777 = vpow.pop %v776
    %v778 = vmul.f32 %v775, 1.442695
    %v779 = vpow.pop %v778
    %v780 = vsel %vm247, %v777, 0.0
    %781 = vadd.xlane.f32.xlu0 %v780
    %v782 = vpop.xlane.xlu0 %781
    %v783 = vsel %vm247, %v779, 0.0
    %784 = vadd.xlane.f32.xlu0 %v783
    %v785 = vpop.xlane.xlu0 %784
    %v786 = vrcp.pop %v782
    %v787 = vmul.f32 %v782, %v786
    %v788 = vsub.f32 1.0, %v787
    %v789 = vmul.f32 %v786, %v788
    %v790 = vadd.f32 %v786, %v789
    %vm791 = vweird.f32 %v782
    %vm792 = vweird.f32 %v786
    %vm793 = vmor %vm791, %vm792
    %v794 = vsel %vm793, %v786, %v790
    %v795 = vand.u32 2147483647, %v782
    %vm796 = vcmp.eq.f32.partialorder %v795, 8.507059e+37
    %v797 = vand.u32 %v782, 2147483648
    %v798 = vor.u32 1.1754944e-38, %v797
    %v799 = vsel %vm796, %v798, %v794
    %v800 = vmul.f32 1.0, %v799
    %v801 = vrcp.pop %v785
    %v802 = vmul.f32 %v785, %v801
    %v803 = vsub.f32 1.0, %v802
    %v804 = vmul.f32 %v801, %v803
    %v805 = vadd.f32 %v801, %v804
    %vm806 = vweird.f32 %v785
    %vm807 = vweird.f32 %v801
    %vm808 = vmor %vm806, %vm807
    %v809 = vsel %vm808, %v801, %v805
    %v810 = vand.u32 2147483647, %v785
    %vm811 = vcmp.eq.f32.partialorder %v810, 8.507059e+37
    %v812 = vand.u32 %v785, 2147483648
    %v813 = vor.u32 1.1754944e-38, %v812
    %v814 = vsel %vm811, %v813, %v809
    %v815 = vmul.f32 1.0, %v814
    %v816 = vmul.f32 %v777, %v800
    %v817 = vmul.f32 %v779, %v815
    %818 = vset.pattern.permute.xlu0 1
    %819 = vperm.xlu0 %818, %v719
    %v820 = vpop.permute.xlu0 %819
    %822 = vset.pattern.permute.xlu0 1
    %823 = vperm.xlu0 %822, %v722
    %v824 = vpop.permute.xlu0 %823
    %v826 = vperm.slane %v745, 1
    %v827 = vadd.f32 %v820, %v826
    %v828 = vadd.f32 %v824, %v826
    %vm829 = vcmp.gt.f32.partialorder %v827, 0.0
    %vm830 = vcmp.gt.f32.partialorder %v828, 0.0
    %v831 = vmul.f32 %v827, 0.2
    %v832 = vmul.f32 %v828, 0.2
    %v833 = vsel %vm829, %v827, %v831
    %v834 = vsel %vm830, %v828, %v832
    %v835 = vsel %vm108, %v833, -1e+30
    %v836 = vsel %vm109, %v834, -1e+30
    %v837 = vsel %vm247, %v835, -inf
    %838 = vmax.xlane.f32.xlu0 %v837
    %v839 = vpop.xlane.xlu0 %838
    %v840 = vsel %vm247, %v836, -inf
    %841 = vmax.xlane.f32.xlu0 %v840
    %v842 = vpop.xlane.xlu0 %841
    %v843 = vsub.f32 %v835, %v839
    %v844 = vsub.f32 %v836, %v842
    %v845 = vmul.f32 %v843, 1.442695
    %v846 = vpow.pop %v845
    %v847 = vmul.f32 %v844, 1.442695
    %v848 = vpow.pop %v847
    %v849 = vsel %vm247, %v846, 0.0
    %850 = vadd.xlane.f32.xlu0 %v849
    %v851 = vpop.xlane.xlu0 %850
    %v852 = vsel %vm247, %v848, 0.0
    %853 = vadd.xlane.f32.xlu0 %v852
    %v854 = vpop.xlane.xlu0 %853
    %v855 = vrcp.pop %v851
    %v856 = vmul.f32 %v851, %v855
    %v857 = vsub.f32 1.0, %v856
    %v858 = vmul.f32 %v855, %v857
    %v859 = vadd.f32 %v855, %v858
    %vm860 = vweird.f32 %v851
    %vm861 = vweird.f32 %v855
    %vm862 = vmor %vm860, %vm861
    %v863 = vsel %vm862, %v855, %v859
    %v864 = vand.u32 2147483647, %v851
    %vm865 = vcmp.eq.f32.partialorder %v864, 8.507059e+37
    %v866 = vand.u32 %v851, 2147483648
    %v867 = vor.u32 1.1754944e-38, %v866
    %v868 = vsel %vm865, %v867, %v863
    %v869 = vmul.f32 1.0, %v868
    %v870 = vrcp.pop %v854
    %v871 = vmul.f32 %v854, %v870
    %v872 = vsub.f32 1.0, %v871
    %v873 = vmul.f32 %v870, %v872
    %v874 = vadd.f32 %v870, %v873
    %vm875 = vweird.f32 %v854
    %vm876 = vweird.f32 %v870
    %vm877 = vmor %vm875, %vm876
    %v878 = vsel %vm877, %v870, %v874
    %v879 = vand.u32 2147483647, %v854
    %vm880 = vcmp.eq.f32.partialorder %v879, 8.507059e+37
    %v881 = vand.u32 %v854, 2147483648
    %v882 = vor.u32 1.1754944e-38, %v881
    %v883 = vsel %vm880, %v882, %v878
    %v884 = vmul.f32 1.0, %v883
    %v885 = vmul.f32 %v846, %v869
    %v886 = vmul.f32 %v848, %v884
    %889 = vrot.lane.b32.xlu0 %v694, 96
    %v890 = vpop.permute.xlu0 %889
    %891 = vrot.lane.b32.xlu0 %v697, 96
    %v892 = vpop.permute.xlu0 %891
    %v896 = vsel %vm247, %v885, 0
    %v899 = vsel %vm247, %v886, 0
    %901 = vmatpush.msra.mxu0 0.0
    %902 = vmatpush.msra.mxu0 0.0
    %903 = vmatpush.msra.mxu0 0.0
    %904 = vmatpush.msra.mxu0 0.0
    %905 = vmatpush.msra.mxu0 0.0
    %906 = vmatpush.msra.mxu0 0.0
    %907 = vmatpush.msra.mxu0 0.0
    %908 = vmatpush.msra.mxu0 0.0
    %909 = vmatpush.msra.mxu0 0.0
    %910 = vmatpush.msra.mxu0 0.0
    %911 = vmatpush.msra.mxu0 0.0
    %912 = vmatpush.msra.mxu0 0.0
    %913 = vmatpush.msra.mxu0 0.0
    %914 = vmatpush.msra.mxu0 0.0
    %915 = vmatpush.msra.mxu0 %v892
    %916 = vmatpush.msra.mxu0 %v890
    %917 = vmatmul.f32.gmra.mxu0 %v896
    %v918 = vpop.f32.mrf.mxu0
    %v919 = vadd.f32 0.0, %v918
    %920 = vmatmul.f32.gmra.mxu0 %v899
    %v921 = vpop.f32.mrf.mxu0
    %v922 = vadd.f32 0.0, %v921
    %923 = vdwg.mxu0
    %v925 = vsel %vm247, %v816, 0
    %v928 = vsel %vm247, %v817, 0
    %930 = vmatpush.msra.mxu0 0.0
    %931 = vmatpush.msra.mxu0 0.0
    %932 = vmatpush.msra.mxu0 0.0
    %933 = vmatpush.msra.mxu0 0.0
    %934 = vmatpush.msra.mxu0 0.0
    %935 = vmatpush.msra.mxu0 0.0
    %936 = vmatpush.msra.mxu0 0.0
    %937 = vmatpush.msra.mxu0 0.0
    %938 = vmatpush.msra.mxu0 0.0
    %939 = vmatpush.msra.mxu0 0.0
    %940 = vmatpush.msra.mxu0 0.0
    %941 = vmatpush.msra.mxu0 0.0
    %942 = vmatpush.msra.mxu0 0.0
    %943 = vmatpush.msra.mxu0 0.0
    %944 = vmatpush.msra.mxu0 %v697
    %945 = vmatpush.msra.mxu0 %v694
    %946 = vmatmul.f32.gmra.mxu0 %v925
    %v947 = vpop.f32.mrf.mxu0
    %v948 = vadd.f32 %v919, %v947
    %949 = vmatmul.f32.gmra.mxu0 %v928
    %v950 = vpop.f32.mrf.mxu0
    %v951 = vadd.f32 %v922, %v950
    %952 = vdwg.mxu0
    %953 = vset.pattern.permute.xlu0 2
    %954 = vperm.xlu0 %953, %v719
    %v955 = vpop.permute.xlu0 %954
    %957 = vset.pattern.permute.xlu0 2
    %958 = vperm.xlu0 %957, %v722
    %v959 = vpop.permute.xlu0 %958
    %v961 = vperm.slane %v745, 2
    %v962 = vadd.f32 %v955, %v961
    %v963 = vadd.f32 %v959, %v961
    %vm964 = vcmp.gt.f32.partialorder %v962, 0.0
    %vm965 = vcmp.gt.f32.partialorder %v963, 0.0
    %v966 = vmul.f32 %v962, 0.2
    %v967 = vmul.f32 %v963, 0.2
    %v968 = vsel %vm964, %v962, %v966
    %v969 = vsel %vm965, %v963, %v967
    %v970 = vsel %vm108, %v968, -1e+30
    %v971 = vsel %vm109, %v969, -1e+30
    %v972 = vsel %vm247, %v970, -inf
    %973 = vmax.xlane.f32.xlu0 %v972
    %v974 = vpop.xlane.xlu0 %973
    %v975 = vsel %vm247, %v971, -inf
    %976 = vmax.xlane.f32.xlu0 %v975
    %v977 = vpop.xlane.xlu0 %976
    %v978 = vsub.f32 %v970, %v974
    %v979 = vsub.f32 %v971, %v977
    %v980 = vmul.f32 %v978, 1.442695
    %v981 = vpow.pop %v980
    %v982 = vmul.f32 %v979, 1.442695
    %v983 = vpow.pop %v982
    %v984 = vsel %vm247, %v981, 0.0
    %985 = vadd.xlane.f32.xlu0 %v984
    %v986 = vpop.xlane.xlu0 %985
    %v987 = vsel %vm247, %v983, 0.0
    %988 = vadd.xlane.f32.xlu0 %v987
    %v989 = vpop.xlane.xlu0 %988
    %v990 = vrcp.pop %v986
    %v991 = vmul.f32 %v986, %v990
    %v992 = vsub.f32 1.0, %v991
    %v993 = vmul.f32 %v990, %v992
    %v994 = vadd.f32 %v990, %v993
    %vm995 = vweird.f32 %v986
    %vm996 = vweird.f32 %v990
    %vm997 = vmor %vm995, %vm996
    %v998 = vsel %vm997, %v990, %v994
    %v999 = vand.u32 2147483647, %v986
    %vm1000 = vcmp.eq.f32.partialorder %v999, 8.507059e+37
    %v1001 = vand.u32 %v986, 2147483648
    %v1002 = vor.u32 1.1754944e-38, %v1001
    %v1003 = vsel %vm1000, %v1002, %v998
    %v1004 = vmul.f32 1.0, %v1003
    %v1005 = vrcp.pop %v989
    %v1006 = vmul.f32 %v989, %v1005
    %v1007 = vsub.f32 1.0, %v1006
    %v1008 = vmul.f32 %v1005, %v1007
    %v1009 = vadd.f32 %v1005, %v1008
    %vm1010 = vweird.f32 %v989
    %vm1011 = vweird.f32 %v1005
    %vm1012 = vmor %vm1010, %vm1011
    %v1013 = vsel %vm1012, %v1005, %v1009
    %v1014 = vand.u32 2147483647, %v989
    %vm1015 = vcmp.eq.f32.partialorder %v1014, 8.507059e+37
    %v1016 = vand.u32 %v989, 2147483648
    %v1017 = vor.u32 1.1754944e-38, %v1016
    %v1018 = vsel %vm1015, %v1017, %v1013
    %v1019 = vmul.f32 1.0, %v1018
    %v1020 = vmul.f32 %v981, %v1004
    %v1021 = vmul.f32 %v983, %v1019
    %1022 = vrot.lane.b32.xlu0 %v694, 64
    %v1023 = vpop.permute.xlu0 %1022
    %1024 = vrot.lane.b32.xlu0 %v697, 64
    %v1025 = vpop.permute.xlu0 %1024
    %v1029 = vsel %vm247, %v1020, 0
    %v1032 = vsel %vm247, %v1021, 0
    %1034 = vmatpush.msra.mxu0 0.0
    %1035 = vmatpush.msra.mxu0 0.0
    %1036 = vmatpush.msra.mxu0 0.0
    %1037 = vmatpush.msra.mxu0 0.0
    %1038 = vmatpush.msra.mxu0 0.0
    %1039 = vmatpush.msra.mxu0 0.0
    %1040 = vmatpush.msra.mxu0 0.0
    %1041 = vmatpush.msra.mxu0 0.0
    %1042 = vmatpush.msra.mxu0 0.0
    %1043 = vmatpush.msra.mxu0 0.0
    %1044 = vmatpush.msra.mxu0 0.0
    %1045 = vmatpush.msra.mxu0 0.0
    %1046 = vmatpush.msra.mxu0 0.0
    %1047 = vmatpush.msra.mxu0 0.0
    %1048 = vmatpush.msra.mxu0 %v1025
    %1049 = vmatpush.msra.mxu0 %v1023
    %1050 = vmatmul.f32.gmra.mxu0 %v1029
    %v1051 = vpop.f32.mrf.mxu0
    %v1052 = vadd.f32 0.0, %v1051
    %1053 = vmatmul.f32.gmra.mxu0 %v1032
    %v1054 = vpop.f32.mrf.mxu0
    %v1055 = vadd.f32 0.0, %v1054
    %1056 = vdwg.mxu0
    %v1057 = vadd.f32 %v948, %v1052
    %v1058 = vadd.f32 %v951, %v1055
    %1059 = vset.pattern.permute.xlu0 3
    %1060 = vperm.xlu0 %1059, %v719
    %v1061 = vpop.permute.xlu0 %1060
    %1063 = vset.pattern.permute.xlu0 3
    %1064 = vperm.xlu0 %1063, %v722
    %v1065 = vpop.permute.xlu0 %1064
    %v1067 = vperm.slane %v745, 3
    %v1068 = vadd.f32 %v1061, %v1067
    %v1069 = vadd.f32 %v1065, %v1067
    %vm1070 = vcmp.gt.f32.partialorder %v1068, 0.0
    %vm1071 = vcmp.gt.f32.partialorder %v1069, 0.0
    %v1072 = vmul.f32 %v1068, 0.2
    %v1073 = vmul.f32 %v1069, 0.2
    %v1074 = vsel %vm1070, %v1068, %v1072
    %v1075 = vsel %vm1071, %v1069, %v1073
    %v1076 = vsel %vm108, %v1074, -1e+30
    %v1077 = vsel %vm109, %v1075, -1e+30
    %v1078 = vsel %vm247, %v1076, -inf
    %1079 = vmax.xlane.f32.xlu0 %v1078
    %v1080 = vpop.xlane.xlu0 %1079
    %v1081 = vsel %vm247, %v1077, -inf
    %1082 = vmax.xlane.f32.xlu0 %v1081
    %v1083 = vpop.xlane.xlu0 %1082
    %v1084 = vsub.f32 %v1076, %v1080
    %v1085 = vsub.f32 %v1077, %v1083
    %v1086 = vmul.f32 %v1084, 1.442695
    %v1087 = vpow.pop %v1086
    %v1088 = vmul.f32 %v1085, 1.442695
    %v1089 = vpow.pop %v1088
    %v1090 = vsel %vm247, %v1087, 0.0
    %1091 = vadd.xlane.f32.xlu0 %v1090
    %v1092 = vpop.xlane.xlu0 %1091
    %v1093 = vsel %vm247, %v1089, 0.0
    %1094 = vadd.xlane.f32.xlu0 %v1093
    %v1095 = vpop.xlane.xlu0 %1094
    %v1096 = vrcp.pop %v1092
    %v1097 = vmul.f32 %v1092, %v1096
    %v1098 = vsub.f32 1.0, %v1097
    %v1099 = vmul.f32 %v1096, %v1098
    %v1100 = vadd.f32 %v1096, %v1099
    %vm1101 = vweird.f32 %v1092
    %vm1102 = vweird.f32 %v1096
    %vm1103 = vmor %vm1101, %vm1102
    %v1104 = vsel %vm1103, %v1096, %v1100
    %v1105 = vand.u32 2147483647, %v1092
    %vm1106 = vcmp.eq.f32.partialorder %v1105, 8.507059e+37
    %v1107 = vand.u32 %v1092, 2147483648
    %v1108 = vor.u32 1.1754944e-38, %v1107
    %v1109 = vsel %vm1106, %v1108, %v1104
    %v1110 = vmul.f32 1.0, %v1109
    %v1111 = vrcp.pop %v1095
    %v1112 = vmul.f32 %v1095, %v1111
    %v1113 = vsub.f32 1.0, %v1112
    %v1114 = vmul.f32 %v1111, %v1113
    %v1115 = vadd.f32 %v1111, %v1114
    %vm1116 = vweird.f32 %v1095
    %vm1117 = vweird.f32 %v1111
    %vm1118 = vmor %vm1116, %vm1117
    %v1119 = vsel %vm1118, %v1111, %v1115
    %v1120 = vand.u32 2147483647, %v1095
    %vm1121 = vcmp.eq.f32.partialorder %v1120, 8.507059e+37
    %v1122 = vand.u32 %v1095, 2147483648
    %v1123 = vor.u32 1.1754944e-38, %v1122
    %v1124 = vsel %vm1121, %v1123, %v1119
    %v1125 = vmul.f32 1.0, %v1124
    %v1126 = vmul.f32 %v1087, %v1110
    %v1127 = vmul.f32 %v1089, %v1125
    %1128 = vrot.lane.b32.xlu0 %v694, 32
    %v1129 = vpop.permute.xlu0 %1128
    %1130 = vrot.lane.b32.xlu0 %v697, 32
    %v1131 = vpop.permute.xlu0 %1130
    %v1135 = vsel %vm247, %v1126, 0
    %v1138 = vsel %vm247, %v1127, 0
    %1140 = vmatpush.msra.mxu0 0.0
    %1141 = vmatpush.msra.mxu0 0.0
    %1142 = vmatpush.msra.mxu0 0.0
    %1143 = vmatpush.msra.mxu0 0.0
    %1144 = vmatpush.msra.mxu0 0.0
    %1145 = vmatpush.msra.mxu0 0.0
    %1146 = vmatpush.msra.mxu0 0.0
    %1147 = vmatpush.msra.mxu0 0.0
    %1148 = vmatpush.msra.mxu0 0.0
    %1149 = vmatpush.msra.mxu0 0.0
    %1150 = vmatpush.msra.mxu0 0.0
    %1151 = vmatpush.msra.mxu0 0.0
    %1152 = vmatpush.msra.mxu0 0.0
    %1153 = vmatpush.msra.mxu0 0.0
    %1154 = vmatpush.msra.mxu0 %v1131
    %1155 = vmatpush.msra.mxu0 %v1129
    %1156 = vmatmul.f32.gmra.mxu0 %v1135
    %v1157 = vpop.f32.mrf.mxu0
    %v1158 = vadd.f32 0.0, %v1157
    %1159 = vmatmul.f32.gmra.mxu0 %v1138
    %v1160 = vpop.f32.mrf.mxu0
    %v1161 = vadd.f32 0.0, %v1160
    %1162 = vdwg.mxu0
    %v1163 = vadd.f32 %v1057, %v1158
    %v1164 = vadd.f32 %v1058, %v1161
    %v1165 = vmul.f32 %v1163, 0.25
    %v1166 = vmul.f32 %v1164, 0.25
    %v1167 = vld [vmem:[#allocation8 + $0x2] sm:$0x1]
    %v1168 = vperm.slane %v1167, 0
    %v1169 = vadd.f32 %v1165, %v1168
    %v1170 = vadd.f32 %v1166, %v1168
    %vm1171 = vcmp.gt.f32.partialorder %v1169, 0.0
    %vm1172 = vcmp.gt.f32.partialorder %v1170, 0.0
    %v1173 = vmin.f32 %v1169, 0.0
    %v1174 = vmin.f32 %v1170, 0.0
    %v1175 = vmul.f32 %v1173, 1.442695
    %v1176 = vpow.pop %v1175
    %v1177 = vmul.f32 %v1174, 1.442695
    %v1178 = vpow.pop %v1177
    %v1179 = vsub.f32 %v1176, 1.0
    %v1180 = vsub.f32 %v1178, 1.0
    %v1181 = vsel %vm1171, %v1169, %v1179
    %v1182 = vsel %vm1172, %v1170, %v1180
    %v1183 = vadd.f32 %v1181, %v663
    %v1184 = vadd.f32 %v1182, %v664
    %s1185 = scalar_lea.vmem [#allocation7], 64
    %v1186 = vld [vmem:[%s1185] sm:$0xff]
    %v1187 = vld [vmem:[%s1185 + $0x8] sm:$0xff]
    %v1188 = vld [vmem:[%s1185 + $0x10] sm:$0xff]
    %v1189 = vld [vmem:[%s1185 + $0x18] sm:$0xff]
    %v1191 = vsel %vm149, %v1183, 0
    %v1194 = vsel %vm149, %v1184, 0
    %1196 = vmatpush.msra.mxu0 0.0
    %1197 = vmatpush.msra.mxu0 0.0
    %1198 = vmatpush.msra.mxu0 0.0
    %1199 = vmatpush.msra.mxu0 0.0
    %1200 = vmatpush.msra.mxu0 0.0
    %1201 = vmatpush.msra.mxu0 0.0
    %1202 = vmatpush.msra.mxu0 0.0
    %1203 = vmatpush.msra.mxu0 0.0
    %1204 = vmatpush.msra.mxu0 0.0
    %1205 = vmatpush.msra.mxu0 0.0
    %1206 = vmatpush.msra.mxu0 0.0
    %1207 = vmatpush.msra.mxu0 0.0
    %1208 = vmatpush.msra.mxu0 %v1189
    %1209 = vmatpush.msra.mxu0 %v1188
    %1210 = vmatpush.msra.mxu0 %v1187
    %1211 = vmatpush.msra.mxu0 %v1186
    %1212 = vmatmul.f32.gmra.mxu0 %v1191
    %v1213 = vpop.f32.mrf.mxu0
    %v1214 = vadd.f32 0.0, %v1213
    %1215 = vmatmul.f32.gmra.mxu0 %v1194
    %v1216 = vpop.f32.mrf.mxu0
    %v1217 = vadd.f32 0.0, %v1216
    %1218 = vdwg.mxu0
    %s1219 = scalar_lea.vmem %s5, 16
    %v1220 = vld [vmem:[%s1219] sm:$0xff]
    %1221 = vmatpush.xpose.msra.mxu0 0.0
    %1222 = vmatpush.xpose.msra.mxu0 0.0
    %1223 = vmatpush.xpose.msra.mxu0 0.0
    %1224 = vmatpush.xpose.msra.mxu0 0.0
    %1225 = vmatpush.xpose.msra.mxu0 0.0
    %1226 = vmatpush.xpose.msra.mxu0 0.0
    %1227 = vmatpush.xpose.msra.mxu0 0.0
    %1228 = vmatpush.xpose.msra.mxu0 0.0
    %1229 = vmatpush.xpose.msra.mxu0 0.0
    %1230 = vmatpush.xpose.msra.mxu0 0.0
    %1231 = vmatpush.xpose.msra.mxu0 0.0
    %1232 = vmatpush.xpose.msra.mxu0 0.0
    %1233 = vmatpush.xpose.msra.mxu0 0.0
    %1234 = vmatpush.xpose.msra.mxu0 0.0
    %1235 = vmatpush.xpose.msra.mxu0 0.0
    %1236 = vmatpush.xpose.msra.mxu0 %v1220
    %1237 = vmatmul.f32.gmra.mxu0 %v1214
    %v1238 = vpop.f32.mrf.mxu0
    %v1239 = vadd.f32 0.0, %v1238
    %1240 = vmatmul.f32.gmra.mxu0 %v1217
    %v1241 = vpop.f32.mrf.mxu0
    %v1242 = vadd.f32 0.0, %v1241
    %1243 = vdwg.mxu0
    %v1245 = vrot.slane %v1220, 4
    %1247 = vmatpush.xpose.msra.mxu0 0.0
    %1248 = vmatpush.xpose.msra.mxu0 0.0
    %1249 = vmatpush.xpose.msra.mxu0 0.0
    %1250 = vmatpush.xpose.msra.mxu0 0.0
    %1251 = vmatpush.xpose.msra.mxu0 0.0
    %1252 = vmatpush.xpose.msra.mxu0 0.0
    %1253 = vmatpush.xpose.msra.mxu0 0.0
    %1254 = vmatpush.xpose.msra.mxu0 0.0
    %1255 = vmatpush.xpose.msra.mxu0 0.0
    %1256 = vmatpush.xpose.msra.mxu0 0.0
    %1257 = vmatpush.xpose.msra.mxu0 0.0
    %1258 = vmatpush.xpose.msra.mxu0 0.0
    %1259 = vmatpush.xpose.msra.mxu0 0.0
    %1260 = vmatpush.xpose.msra.mxu0 0.0
    %1261 = vmatpush.xpose.msra.mxu0 %v1217
    %1262 = vmatpush.xpose.msra.mxu0 %v1214
    %1263 = vmatmul.f32.gmra.mxu0 %v1245
    %v1264 = vpop.f32.mrf.mxu0
    %v1265 = vadd.f32 0.0, %v1264
    %1266 = vdwg.mxu0
    %1268 = vset.pattern.permute.xlu0 0
    %1269 = vperm.xlu0 %1268, %v1239
    %v1270 = vpop.permute.xlu0 %1269
    %1273 = vset.pattern.permute.xlu0 0
    %1274 = vperm.xlu0 %1273, %v1242
    %v1275 = vpop.permute.xlu0 %1274
    %v1277 = vperm.slane %v1265, 0
    %v1278 = vadd.f32 %v1270, %v1277
    %v1279 = vadd.f32 %v1275, %v1277
    %vm1280 = vcmp.gt.f32.partialorder %v1278, 0.0
    %vm1281 = vcmp.gt.f32.partialorder %v1279, 0.0
    %v1282 = vmul.f32 %v1278, 0.2
    %v1283 = vmul.f32 %v1279, 0.2
    %v1284 = vsel %vm1280, %v1278, %v1282
    %v1285 = vsel %vm1281, %v1279, %v1283
    %v1286 = vsel %vm108, %v1284, -1e+30
    %v1287 = vsel %vm109, %v1285, -1e+30
    %v1288 = vsel %vm247, %v1286, -inf
    %1289 = vmax.xlane.f32.xlu0 %v1288
    %v1290 = vpop.xlane.xlu0 %1289
    %v1291 = vsel %vm247, %v1287, -inf
    %1292 = vmax.xlane.f32.xlu0 %v1291
    %v1293 = vpop.xlane.xlu0 %1292
    %v1294 = vsub.f32 %v1286, %v1290
    %v1295 = vsub.f32 %v1287, %v1293
    %v1296 = vmul.f32 %v1294, 1.442695
    %v1297 = vpow.pop %v1296
    %v1298 = vmul.f32 %v1295, 1.442695
    %v1299 = vpow.pop %v1298
    %v1300 = vsel %vm247, %v1297, 0.0
    %1301 = vadd.xlane.f32.xlu0 %v1300
    %v1302 = vpop.xlane.xlu0 %1301
    %v1303 = vsel %vm247, %v1299, 0.0
    %1304 = vadd.xlane.f32.xlu0 %v1303
    %v1305 = vpop.xlane.xlu0 %1304
    %v1306 = vrcp.pop %v1302
    %v1307 = vmul.f32 %v1302, %v1306
    %v1308 = vsub.f32 1.0, %v1307
    %v1309 = vmul.f32 %v1306, %v1308
    %v1310 = vadd.f32 %v1306, %v1309
    %vm1311 = vweird.f32 %v1302
    %vm1312 = vweird.f32 %v1306
    %vm1313 = vmor %vm1311, %vm1312
    %v1314 = vsel %vm1313, %v1306, %v1310
    %v1315 = vand.u32 2147483647, %v1302
    %vm1316 = vcmp.eq.f32.partialorder %v1315, 8.507059e+37
    %v1317 = vand.u32 %v1302, 2147483648
    %v1318 = vor.u32 1.1754944e-38, %v1317
    %v1319 = vsel %vm1316, %v1318, %v1314
    %v1320 = vmul.f32 1.0, %v1319
    %v1321 = vrcp.pop %v1305
    %v1322 = vmul.f32 %v1305, %v1321
    %v1323 = vsub.f32 1.0, %v1322
    %v1324 = vmul.f32 %v1321, %v1323
    %v1325 = vadd.f32 %v1321, %v1324
    %vm1326 = vweird.f32 %v1305
    %vm1327 = vweird.f32 %v1321
    %vm1328 = vmor %vm1326, %vm1327
    %v1329 = vsel %vm1328, %v1321, %v1325
    %v1330 = vand.u32 2147483647, %v1305
    %vm1331 = vcmp.eq.f32.partialorder %v1330, 8.507059e+37
    %v1332 = vand.u32 %v1305, 2147483648
    %v1333 = vor.u32 1.1754944e-38, %v1332
    %v1334 = vsel %vm1331, %v1333, %v1329
    %v1335 = vmul.f32 1.0, %v1334
    %v1336 = vmul.f32 %v1297, %v1320
    %v1337 = vmul.f32 %v1299, %v1335
    %1338 = vset.pattern.permute.xlu0 1
    %1339 = vperm.xlu0 %1338, %v1239
    %v1340 = vpop.permute.xlu0 %1339
    %1342 = vset.pattern.permute.xlu0 1
    %1343 = vperm.xlu0 %1342, %v1242
    %v1344 = vpop.permute.xlu0 %1343
    %v1346 = vperm.slane %v1265, 1
    %v1347 = vadd.f32 %v1340, %v1346
    %v1348 = vadd.f32 %v1344, %v1346
    %vm1349 = vcmp.gt.f32.partialorder %v1347, 0.0
    %vm1350 = vcmp.gt.f32.partialorder %v1348, 0.0
    %v1351 = vmul.f32 %v1347, 0.2
    %v1352 = vmul.f32 %v1348, 0.2
    %v1353 = vsel %vm1349, %v1347, %v1351
    %v1354 = vsel %vm1350, %v1348, %v1352
    %v1355 = vsel %vm108, %v1353, -1e+30
    %v1356 = vsel %vm109, %v1354, -1e+30
    %v1357 = vsel %vm247, %v1355, -inf
    %1358 = vmax.xlane.f32.xlu0 %v1357
    %v1359 = vpop.xlane.xlu0 %1358
    %v1360 = vsel %vm247, %v1356, -inf
    %1361 = vmax.xlane.f32.xlu0 %v1360
    %v1362 = vpop.xlane.xlu0 %1361
    %v1363 = vsub.f32 %v1355, %v1359
    %v1364 = vsub.f32 %v1356, %v1362
    %v1365 = vmul.f32 %v1363, 1.442695
    %v1366 = vpow.pop %v1365
    %v1367 = vmul.f32 %v1364, 1.442695
    %v1368 = vpow.pop %v1367
    %v1369 = vsel %vm247, %v1366, 0.0
    %1370 = vadd.xlane.f32.xlu0 %v1369
    %v1371 = vpop.xlane.xlu0 %1370
    %v1372 = vsel %vm247, %v1368, 0.0
    %1373 = vadd.xlane.f32.xlu0 %v1372
    %v1374 = vpop.xlane.xlu0 %1373
    %v1375 = vrcp.pop %v1371
    %v1376 = vmul.f32 %v1371, %v1375
    %v1377 = vsub.f32 1.0, %v1376
    %v1378 = vmul.f32 %v1375, %v1377
    %v1379 = vadd.f32 %v1375, %v1378
    %vm1380 = vweird.f32 %v1371
    %vm1381 = vweird.f32 %v1375
    %vm1382 = vmor %vm1380, %vm1381
    %v1383 = vsel %vm1382, %v1375, %v1379
    %v1384 = vand.u32 2147483647, %v1371
    %vm1385 = vcmp.eq.f32.partialorder %v1384, 8.507059e+37
    %v1386 = vand.u32 %v1371, 2147483648
    %v1387 = vor.u32 1.1754944e-38, %v1386
    %v1388 = vsel %vm1385, %v1387, %v1383
    %v1389 = vmul.f32 1.0, %v1388
    %v1390 = vrcp.pop %v1374
    %v1391 = vmul.f32 %v1374, %v1390
    %v1392 = vsub.f32 1.0, %v1391
    %v1393 = vmul.f32 %v1390, %v1392
    %v1394 = vadd.f32 %v1390, %v1393
    %vm1395 = vweird.f32 %v1374
    %vm1396 = vweird.f32 %v1390
    %vm1397 = vmor %vm1395, %vm1396
    %v1398 = vsel %vm1397, %v1390, %v1394
    %v1399 = vand.u32 2147483647, %v1374
    %vm1400 = vcmp.eq.f32.partialorder %v1399, 8.507059e+37
    %v1401 = vand.u32 %v1374, 2147483648
    %v1402 = vor.u32 1.1754944e-38, %v1401
    %v1403 = vsel %vm1400, %v1402, %v1398
    %v1404 = vmul.f32 1.0, %v1403
    %v1405 = vmul.f32 %v1366, %v1389
    %v1406 = vmul.f32 %v1368, %v1404
    %1409 = vrot.lane.b32.xlu0 %v1214, 96
    %v1410 = vpop.permute.xlu0 %1409
    %1411 = vrot.lane.b32.xlu0 %v1217, 96
    %v1412 = vpop.permute.xlu0 %1411
    %v1416 = vsel %vm247, %v1405, 0
    %v1419 = vsel %vm247, %v1406, 0
    %1421 = vmatpush.msra.mxu0 0.0
    %1422 = vmatpush.msra.mxu0 0.0
    %1423 = vmatpush.msra.mxu0 0.0
    %1424 = vmatpush.msra.mxu0 0.0
    %1425 = vmatpush.msra.mxu0 0.0
    %1426 = vmatpush.msra.mxu0 0.0
    %1427 = vmatpush.msra.mxu0 0.0
    %1428 = vmatpush.msra.mxu0 0.0
    %1429 = vmatpush.msra.mxu0 0.0
    %1430 = vmatpush.msra.mxu0 0.0
    %1431 = vmatpush.msra.mxu0 0.0
    %1432 = vmatpush.msra.mxu0 0.0
    %1433 = vmatpush.msra.mxu0 0.0
    %1434 = vmatpush.msra.mxu0 0.0
    %1435 = vmatpush.msra.mxu0 %v1412
    %1436 = vmatpush.msra.mxu0 %v1410
    %1437 = vmatmul.f32.gmra.mxu0 %v1416
    %v1438 = vpop.f32.mrf.mxu0
    %v1439 = vadd.f32 0.0, %v1438
    %1440 = vmatmul.f32.gmra.mxu0 %v1419
    %v1441 = vpop.f32.mrf.mxu0
    %v1442 = vadd.f32 0.0, %v1441
    %1443 = vdwg.mxu0
    %v1445 = vsel %vm247, %v1336, 0
    %v1448 = vsel %vm247, %v1337, 0
    %1450 = vmatpush.msra.mxu0 0.0
    %1451 = vmatpush.msra.mxu0 0.0
    %1452 = vmatpush.msra.mxu0 0.0
    %1453 = vmatpush.msra.mxu0 0.0
    %1454 = vmatpush.msra.mxu0 0.0
    %1455 = vmatpush.msra.mxu0 0.0
    %1456 = vmatpush.msra.mxu0 0.0
    %1457 = vmatpush.msra.mxu0 0.0
    %1458 = vmatpush.msra.mxu0 0.0
    %1459 = vmatpush.msra.mxu0 0.0
    %1460 = vmatpush.msra.mxu0 0.0
    %1461 = vmatpush.msra.mxu0 0.0
    %1462 = vmatpush.msra.mxu0 0.0
    %1463 = vmatpush.msra.mxu0 0.0
    %1464 = vmatpush.msra.mxu0 %v1217
    %1465 = vmatpush.msra.mxu0 %v1214
    %1466 = vmatmul.f32.gmra.mxu0 %v1445
    %v1467 = vpop.f32.mrf.mxu0
    %v1468 = vadd.f32 %v1439, %v1467
    %1469 = vmatmul.f32.gmra.mxu0 %v1448
    %v1470 = vpop.f32.mrf.mxu0
    %v1471 = vadd.f32 %v1442, %v1470
    %1472 = vdwg.mxu0
    %1473 = vset.pattern.permute.xlu0 2
    %1474 = vperm.xlu0 %1473, %v1239
    %v1475 = vpop.permute.xlu0 %1474
    %1477 = vset.pattern.permute.xlu0 2
    %1478 = vperm.xlu0 %1477, %v1242
    %v1479 = vpop.permute.xlu0 %1478
    %v1481 = vperm.slane %v1265, 2
    %v1482 = vadd.f32 %v1475, %v1481
    %v1483 = vadd.f32 %v1479, %v1481
    %vm1484 = vcmp.gt.f32.partialorder %v1482, 0.0
    %vm1485 = vcmp.gt.f32.partialorder %v1483, 0.0
    %v1486 = vmul.f32 %v1482, 0.2
    %v1487 = vmul.f32 %v1483, 0.2
    %v1488 = vsel %vm1484, %v1482, %v1486
    %v1489 = vsel %vm1485, %v1483, %v1487
    %v1490 = vsel %vm108, %v1488, -1e+30
    %v1491 = vsel %vm109, %v1489, -1e+30
    %v1492 = vsel %vm247, %v1490, -inf
    %1493 = vmax.xlane.f32.xlu0 %v1492
    %v1494 = vpop.xlane.xlu0 %1493
    %v1495 = vsel %vm247, %v1491, -inf
    %1496 = vmax.xlane.f32.xlu0 %v1495
    %v1497 = vpop.xlane.xlu0 %1496
    %v1498 = vsub.f32 %v1490, %v1494
    %v1499 = vsub.f32 %v1491, %v1497
    %v1500 = vmul.f32 %v1498, 1.442695
    %v1501 = vpow.pop %v1500
    %v1502 = vmul.f32 %v1499, 1.442695
    %v1503 = vpow.pop %v1502
    %v1504 = vsel %vm247, %v1501, 0.0
    %1505 = vadd.xlane.f32.xlu0 %v1504
    %v1506 = vpop.xlane.xlu0 %1505
    %v1507 = vsel %vm247, %v1503, 0.0
    %1508 = vadd.xlane.f32.xlu0 %v1507
    %v1509 = vpop.xlane.xlu0 %1508
    %v1510 = vrcp.pop %v1506
    %v1511 = vmul.f32 %v1506, %v1510
    %v1512 = vsub.f32 1.0, %v1511
    %v1513 = vmul.f32 %v1510, %v1512
    %v1514 = vadd.f32 %v1510, %v1513
    %vm1515 = vweird.f32 %v1506
    %vm1516 = vweird.f32 %v1510
    %vm1517 = vmor %vm1515, %vm1516
    %v1518 = vsel %vm1517, %v1510, %v1514
    %v1519 = vand.u32 2147483647, %v1506
    %vm1520 = vcmp.eq.f32.partialorder %v1519, 8.507059e+37
    %v1521 = vand.u32 %v1506, 2147483648
    %v1522 = vor.u32 1.1754944e-38, %v1521
    %v1523 = vsel %vm1520, %v1522, %v1518
    %v1524 = vmul.f32 1.0, %v1523
    %v1525 = vrcp.pop %v1509
    %v1526 = vmul.f32 %v1509, %v1525
    %v1527 = vsub.f32 1.0, %v1526
    %v1528 = vmul.f32 %v1525, %v1527
    %v1529 = vadd.f32 %v1525, %v1528
    %vm1530 = vweird.f32 %v1509
    %vm1531 = vweird.f32 %v1525
    %vm1532 = vmor %vm1530, %vm1531
    %v1533 = vsel %vm1532, %v1525, %v1529
    %v1534 = vand.u32 2147483647, %v1509
    %vm1535 = vcmp.eq.f32.partialorder %v1534, 8.507059e+37
    %v1536 = vand.u32 %v1509, 2147483648
    %v1537 = vor.u32 1.1754944e-38, %v1536
    %v1538 = vsel %vm1535, %v1537, %v1533
    %v1539 = vmul.f32 1.0, %v1538
    %v1540 = vmul.f32 %v1501, %v1524
    %v1541 = vmul.f32 %v1503, %v1539
    %1542 = vrot.lane.b32.xlu0 %v1214, 64
    %v1543 = vpop.permute.xlu0 %1542
    %1544 = vrot.lane.b32.xlu0 %v1217, 64
    %v1545 = vpop.permute.xlu0 %1544
    %v1549 = vsel %vm247, %v1540, 0
    %v1552 = vsel %vm247, %v1541, 0
    %1554 = vmatpush.msra.mxu0 0.0
    %1555 = vmatpush.msra.mxu0 0.0
    %1556 = vmatpush.msra.mxu0 0.0
    %1557 = vmatpush.msra.mxu0 0.0
    %1558 = vmatpush.msra.mxu0 0.0
    %1559 = vmatpush.msra.mxu0 0.0
    %1560 = vmatpush.msra.mxu0 0.0
    %1561 = vmatpush.msra.mxu0 0.0
    %1562 = vmatpush.msra.mxu0 0.0
    %1563 = vmatpush.msra.mxu0 0.0
    %1564 = vmatpush.msra.mxu0 0.0
    %1565 = vmatpush.msra.mxu0 0.0
    %1566 = vmatpush.msra.mxu0 0.0
    %1567 = vmatpush.msra.mxu0 0.0
    %1568 = vmatpush.msra.mxu0 %v1545
    %1569 = vmatpush.msra.mxu0 %v1543
    %1570 = vmatmul.f32.gmra.mxu0 %v1549
    %v1571 = vpop.f32.mrf.mxu0
    %v1572 = vadd.f32 0.0, %v1571
    %1573 = vmatmul.f32.gmra.mxu0 %v1552
    %v1574 = vpop.f32.mrf.mxu0
    %v1575 = vadd.f32 0.0, %v1574
    %1576 = vdwg.mxu0
    %v1577 = vadd.f32 %v1468, %v1572
    %v1578 = vadd.f32 %v1471, %v1575
    %1579 = vset.pattern.permute.xlu0 3
    %1580 = vperm.xlu0 %1579, %v1239
    %v1581 = vpop.permute.xlu0 %1580
    %1583 = vset.pattern.permute.xlu0 3
    %1584 = vperm.xlu0 %1583, %v1242
    %v1585 = vpop.permute.xlu0 %1584
    %v1587 = vperm.slane %v1265, 3
    %v1588 = vadd.f32 %v1581, %v1587
    %v1589 = vadd.f32 %v1585, %v1587
    %vm1590 = vcmp.gt.f32.partialorder %v1588, 0.0
    %vm1591 = vcmp.gt.f32.partialorder %v1589, 0.0
    %v1592 = vmul.f32 %v1588, 0.2
    %v1593 = vmul.f32 %v1589, 0.2
    %v1594 = vsel %vm1590, %v1588, %v1592
    %v1595 = vsel %vm1591, %v1589, %v1593
    %v1596 = vsel %vm108, %v1594, -1e+30
    %v1597 = vsel %vm109, %v1595, -1e+30
    %v1598 = vsel %vm247, %v1596, -inf
    %1599 = vmax.xlane.f32.xlu0 %v1598
    %v1600 = vpop.xlane.xlu0 %1599
    %v1601 = vsel %vm247, %v1597, -inf
    %1602 = vmax.xlane.f32.xlu0 %v1601
    %v1603 = vpop.xlane.xlu0 %1602
    %v1604 = vsub.f32 %v1596, %v1600
    %v1605 = vsub.f32 %v1597, %v1603
    %v1606 = vmul.f32 %v1604, 1.442695
    %v1607 = vpow.pop %v1606
    %v1608 = vmul.f32 %v1605, 1.442695
    %v1609 = vpow.pop %v1608
    %v1610 = vsel %vm247, %v1607, 0.0
    %1611 = vadd.xlane.f32.xlu0 %v1610
    %v1612 = vpop.xlane.xlu0 %1611
    %v1613 = vsel %vm247, %v1609, 0.0
    %1614 = vadd.xlane.f32.xlu0 %v1613
    %v1615 = vpop.xlane.xlu0 %1614
    %v1616 = vrcp.pop %v1612
    %v1617 = vmul.f32 %v1612, %v1616
    %v1618 = vsub.f32 1.0, %v1617
    %v1619 = vmul.f32 %v1616, %v1618
    %v1620 = vadd.f32 %v1616, %v1619
    %vm1621 = vweird.f32 %v1612
    %vm1622 = vweird.f32 %v1616
    %vm1623 = vmor %vm1621, %vm1622
    %v1624 = vsel %vm1623, %v1616, %v1620
    %v1625 = vand.u32 2147483647, %v1612
    %vm1626 = vcmp.eq.f32.partialorder %v1625, 8.507059e+37
    %v1627 = vand.u32 %v1612, 2147483648
    %v1628 = vor.u32 1.1754944e-38, %v1627
    %v1629 = vsel %vm1626, %v1628, %v1624
    %v1630 = vmul.f32 1.0, %v1629
    %v1631 = vrcp.pop %v1615
    %v1632 = vmul.f32 %v1615, %v1631
    %v1633 = vsub.f32 1.0, %v1632
    %v1634 = vmul.f32 %v1631, %v1633
    %v1635 = vadd.f32 %v1631, %v1634
    %vm1636 = vweird.f32 %v1615
    %vm1637 = vweird.f32 %v1631
    %vm1638 = vmor %vm1636, %vm1637
    %v1639 = vsel %vm1638, %v1631, %v1635
    %v1640 = vand.u32 2147483647, %v1615
    %vm1641 = vcmp.eq.f32.partialorder %v1640, 8.507059e+37
    %v1642 = vand.u32 %v1615, 2147483648
    %v1643 = vor.u32 1.1754944e-38, %v1642
    %v1644 = vsel %vm1641, %v1643, %v1639
    %v1645 = vmul.f32 1.0, %v1644
    %v1646 = vmul.f32 %v1607, %v1630
    %v1647 = vmul.f32 %v1609, %v1645
    %1648 = vrot.lane.b32.xlu0 %v1214, 32
    %v1649 = vpop.permute.xlu0 %1648
    %1650 = vrot.lane.b32.xlu0 %v1217, 32
    %v1651 = vpop.permute.xlu0 %1650
    %v1655 = vsel %vm247, %v1646, 0
    %v1658 = vsel %vm247, %v1647, 0
    %1660 = vmatpush.msra.mxu0 0.0
    %1661 = vmatpush.msra.mxu0 0.0
    %1662 = vmatpush.msra.mxu0 0.0
    %1663 = vmatpush.msra.mxu0 0.0
    %1664 = vmatpush.msra.mxu0 0.0
    %1665 = vmatpush.msra.mxu0 0.0
    %1666 = vmatpush.msra.mxu0 0.0
    %1667 = vmatpush.msra.mxu0 0.0
    %1668 = vmatpush.msra.mxu0 0.0
    %1669 = vmatpush.msra.mxu0 0.0
    %1670 = vmatpush.msra.mxu0 0.0
    %1671 = vmatpush.msra.mxu0 0.0
    %1672 = vmatpush.msra.mxu0 0.0
    %1673 = vmatpush.msra.mxu0 0.0
    %1674 = vmatpush.msra.mxu0 %v1651
    %1675 = vmatpush.msra.mxu0 %v1649
    %1676 = vmatmul.f32.gmra.mxu0 %v1655
    %v1677 = vpop.f32.mrf.mxu0
    %v1678 = vadd.f32 0.0, %v1677
    %1679 = vmatmul.f32.gmra.mxu0 %v1658
    %v1680 = vpop.f32.mrf.mxu0
    %v1681 = vadd.f32 0.0, %v1680
    %1682 = vdwg.mxu0
    %v1683 = vadd.f32 %v1577, %v1678
    %v1684 = vadd.f32 %v1578, %v1681
    %v1685 = vmul.f32 %v1683, 0.25
    %v1686 = vmul.f32 %v1684, 0.25
    %v1687 = vld [vmem:[#allocation8 + $0x3] sm:$0x1]
    %v1688 = vperm.slane %v1687, 0
    %v1689 = vadd.f32 %v1685, %v1688
    %v1690 = vadd.f32 %v1686, %v1688
    %vm1691 = vcmp.gt.f32.partialorder %v1689, 0.0
    %vm1692 = vcmp.gt.f32.partialorder %v1690, 0.0
    %v1693 = vmin.f32 %v1689, 0.0
    %v1694 = vmin.f32 %v1690, 0.0
    %v1695 = vmul.f32 %v1693, 1.442695
    %v1696 = vpow.pop %v1695
    %v1697 = vmul.f32 %v1694, 1.442695
    %v1698 = vpow.pop %v1697
    %v1699 = vsub.f32 %v1696, 1.0
    %v1700 = vsub.f32 %v1698, 1.0
    %v1701 = vsel %vm1691, %v1689, %v1699
    %v1702 = vsel %vm1692, %v1690, %v1700
    %v1703 = vadd.f32 %v1701, %v1183
    %v1704 = vadd.f32 %v1702, %v1184
    %v1705 = vld [vmem:[%s2] sm:$0x3]
    %v1707 = vsel %vm247, %v1705, 0
    %1709 = vmatpush.msra.mxu0 0.0
    %1710 = vmatpush.msra.mxu0 0.0
    %1711 = vmatpush.msra.mxu0 0.0
    %1712 = vmatpush.msra.mxu0 0.0
    %1713 = vmatpush.msra.mxu0 0.0
    %1714 = vmatpush.msra.mxu0 0.0
    %1715 = vmatpush.msra.mxu0 0.0
    %1716 = vmatpush.msra.mxu0 0.0
    %1717 = vmatpush.msra.mxu0 0.0
    %1718 = vmatpush.msra.mxu0 0.0
    %1719 = vmatpush.msra.mxu0 0.0
    %1720 = vmatpush.msra.mxu0 0.0
    %1721 = vmatpush.msra.mxu0 0.0
    %1722 = vmatpush.msra.mxu0 0.0
    %1723 = vmatpush.msra.mxu0 %v1704
    %1724 = vmatpush.msra.mxu0 %v1703
    %1725 = vmatmul.f32.gmra.mxu0 %v1707
    %v1726 = vpop.f32.mrf.mxu0
    %v1727 = vadd.f32 0.0, %v1726
    %1728 = vdwg.mxu0
    %v1729 = vld [vmem:[#allocation10] sm:$0xff]
    %v1730 = vld [vmem:[#allocation10 + $0x8] sm:$0xff]
    %v1731 = vld [vmem:[#allocation10 + $0x10] sm:$0xff]
    %v1732 = vld [vmem:[#allocation10 + $0x18] sm:$0xff]
    %v1733 = vld [vmem:[#allocation8 + $0x4] sm:$0x1]
    %v1734 = vld [vmem:[#allocation8 + $0x5] sm:$0x1]
    %v1735 = vperm.slane %v1733, 0
    %v1737 = vsel %vm149, %v1727, 0
    %1739 = vmatpush.msra.mxu0 0.0
    %1740 = vmatpush.msra.mxu0 0.0
    %1741 = vmatpush.msra.mxu0 0.0
    %1742 = vmatpush.msra.mxu0 0.0
    %1743 = vmatpush.msra.mxu0 0.0
    %1744 = vmatpush.msra.mxu0 0.0
    %1745 = vmatpush.msra.mxu0 0.0
    %1746 = vmatpush.msra.mxu0 0.0
    %1747 = vmatpush.msra.mxu0 0.0
    %1748 = vmatpush.msra.mxu0 0.0
    %1749 = vmatpush.msra.mxu0 0.0
    %1750 = vmatpush.msra.mxu0 0.0
    %1751 = vmatpush.msra.mxu0 %v1732
    %1752 = vmatpush.msra.mxu0 %v1731
    %1753 = vmatpush.msra.mxu0 %v1730
    %1754 = vmatpush.msra.mxu0 %v1729
    %1755 = vmatmul.f32.gmra.mxu0 %v1737
    %v1756 = vpop.f32.mrf.mxu0
    %v1757 = vadd.f32 %v1735, %v1756
    %1758 = vdwg.mxu0
    %v1759 = vmax.f32 %v1757, 0.0
    %1761 = vset.pattern.permute.xlu0 0
    %1762 = vperm.xlu0 %1761, %v1734
    %v1763 = vpop.permute.xlu0 %1762
    %1769 = vrot.lane.b32.xlu0 %v1729, 96
    %v1770 = vpop.permute.xlu0 %1769
    %1771 = vrot.lane.b32.xlu0 %v1730, 96
    %v1772 = vpop.permute.xlu0 %1771
    %1773 = vrot.lane.b32.xlu0 %v1731, 96
    %v1774 = vpop.permute.xlu0 %1773
    %1775 = vrot.lane.b32.xlu0 %v1732, 96
    %v1776 = vpop.permute.xlu0 %1775
    %1781 = vxpose.xlu0.b32.start [1/16] %v1770, 128
    %1782 = vxpose.xlu0.b32.cont [2/16] %v1772, 128
    %1783 = vxpose.xlu0.b32.cont [3/16] %v1774, 128
    %1784 = vxpose.xlu0.b32.cont [4/16] %v1776, 128
    %1785 = vxpose.xlu0.b32.cont [5/16] 0.0, 128
    %1786 = vxpose.xlu0.b32.cont [6/16] 0.0, 128
    %1787 = vxpose.xlu0.b32.cont [7/16] 0.0, 128
    %1788 = vxpose.xlu0.b32.cont [8/16] 0.0, 128
    %1789 = vxpose.xlu0.b32.cont [9/16] 0.0, 128
    %1790 = vxpose.xlu0.b32.cont [10/16] 0.0, 128
    %1791 = vxpose.xlu0.b32.cont [11/16] 0.0, 128
    %1792 = vxpose.xlu0.b32.cont [12/16] 0.0, 128
    %1793 = vxpose.xlu0.b32.cont [13/16] 0.0, 128
    %1794 = vxpose.xlu0.b32.cont [14/16] 0.0, 128
    %1795 = vxpose.xlu0.b32.cont [15/16] 0.0, 128
    %1796 = vxpose.xlu0.b32.end [16/16] 0.0, 128
    %v1797 = vpop.trf.xlu0
    %v1798 = vpop.trf.xlu0
    %v1799 = vpop.trf.xlu0
    %v1800 = vpop.trf.xlu0
    %v1801 = vpop.trf.xlu0
    %v1802 = vpop.trf.xlu0
    %v1803 = vpop.trf.xlu0
    %v1804 = vpop.trf.xlu0
    %v1805 = vpop.trf.xlu0
    %v1806 = vpop.trf.xlu0
    %v1807 = vpop.trf.xlu0
    %v1808 = vpop.trf.xlu0
    %v1809 = vpop.trf.xlu0
    %v1810 = vpop.trf.xlu0
    %v1811 = vpop.trf.xlu0
    %v1812 = vpop.trf.xlu0
    %v1814 = vsel %vm149, %v1797, 0
    %v1817 = vsel %vm149, %v1759, 0
    %1819 = vmatpush.xpose.msra.mxu0 0.0
    %1820 = vmatpush.xpose.msra.mxu0 0.0
    %1821 = vmatpush.xpose.msra.mxu0 0.0
    %1822 = vmatpush.xpose.msra.mxu0 0.0
    %1823 = vmatpush.xpose.msra.mxu0 0.0
    %1824 = vmatpush.xpose.msra.mxu0 0.0
    %1825 = vmatpush.xpose.msra.mxu0 0.0
    %1826 = vmatpush.xpose.msra.mxu0 0.0
    %1827 = vmatpush.xpose.msra.mxu0 0.0
    %1828 = vmatpush.xpose.msra.mxu0 0.0
    %1829 = vmatpush.xpose.msra.mxu0 0.0
    %1830 = vmatpush.xpose.msra.mxu0 0.0
    %1831 = vmatpush.xpose.msra.mxu0 0.0
    %1832 = vmatpush.xpose.msra.mxu0 0.0
    %1833 = vmatpush.xpose.msra.mxu0 0.0
    %1834 = vmatpush.xpose.msra.mxu0 %v1817
    %1835 = vmatmul.f32.gmra.mxu0 %v1814
    %v1836 = vpop.f32.mrf.mxu0
    %v1837 = vadd.f32 %v1763, %v1836
    %1838 = vdwg.mxu0
    %vm1839 = vcmask 8192
    %1840 = vst.msk [vmem:[#allocation11] sm:$0x1] %vm1839, %v1837
    // Predicated region
    $region54: #{tpu_custom_call.1} parent=1 // pred_check
      _
    $region55: #{tpu_custom_call.1} parent=1 // pred_check_branch
      %1842 = sbr.rel (0) target = $region57
    $region56: #{tpu_custom_call.1} parent=1 // pred_region
      %1844 = vsyncadd [#allocation4], 0
      %s1846 = sshll.u32 [#allocation11], 4
      %s1847 = int_to_ptr.vmem [resolvable:$true] %s1846
      %s1848 = sshll.u32 %s8, 4
      %s1849 = int_to_ptr.hbm [resolvable:$true] %s1848
      %1851 = dma.vmem_to_hbm [thread:$0]  %s1847, 16, %s1849, [#allocation4]
    $region57: #{tpu_custom_call.1} parent=1 // pred_fallthru
      _
    // Predicated region
    $region58: #{tpu_custom_call.1} parent=1 // pred_check
      _
    $region59: #{tpu_custom_call.1} parent=1 // pred_check_branch
      %1853 = sbr.rel (0) target = $region61
    $region60: #{tpu_custom_call.1} parent=1 // pred_region
      %1855 = dma.done [#allocation4], 16
    $region61: #{tpu_custom_call.1} parent=1 // pred_fallthru
      _
    %1856 = vsyncpa [#allocation3], 1
    %1857 = vsyncpa [#allocation6], 1
    %1858 = vsyncpa [#allocation9], 1
    %1859 = vsyncpa [#allocation4], 1

</llo_original>
